<compile_context>
chip_gen: v5e
topology: v5e:2x2
jax: 0.10.0
libtpu: 0.0.40
codegen_flags: <defaults>
</compile_context>

<pallas_src>
import functools
import math

import jax
import jax.numpy as jnp
from jax.experimental import pallas as pl
from jax.experimental.pallas import tpu as pltpu


def _layer_norm(x, gamma, beta, eps=1e-5):
    # PyTorch LayerNorm: biased variance over the last dim, eps inside rsqrt.
    mean = jnp.mean(x, axis=-1, keepdims=True)
    var = jnp.mean((x - mean) ** 2, axis=-1, keepdims=True)
    return (x - mean) * jax.lax.rsqrt(var + eps) * gamma + beta


def encoder_layer_kernel(
    # inputs
    xq_ref, xkv_ref,
    wq_ref, bq_ref,            # (D, D) scaled, (D, 1) scaled   -> Q^T = Wq' x^T + bq'
    wkv_ref, bkv_ref,          # (2D, D), (2D, 1)               -> [K;V]^T
    wo_ref, bo_ref,            # (1, hd, D) per-head block, (1, D)
    w1_ref, b1_ref,            # (D, d_ff), (1, d_ff)
    w2_ref, b2_ref,            # (d_ff, D), (1, D)
    g1_ref, be1_ref, g2_ref, be2_ref,   # (1, D) each
    # outputs
    out_ref, attn_ref,
    # scratch
    kvT_ref, qT_ref, acc_ref,
    *, n_heads, head_dim, d_model, matmul_dtype,
):
    jq = pl.program_id(1)   # query-tile index
    h = pl.program_id(2)    # head index
    cdt = matmul_dtype

    # ---- once per batch element: fused K/V projection, full sequence, stored
    #      transposed (feature-major) so per-head slices are sublane slices. ----
    @pl.when((jq == 0) & (h == 0))
    def _():
        x_full = xkv_ref[0]                                         # (S, D)
        kvT = jax.lax.dot_general(
            wkv_ref[...].astype(cdt), x_full.astype(cdt),
            (((1,), (1,)), ((), ())),
            preferred_element_type=jnp.float32)                     # (2D, S)
        kvT_ref[...] = kvT + bkv_ref[...]

    # ---- once per query tile: Q projection (scale already folded in), plus
    #      zero the output-projection accumulator. ----
    @pl.when(h == 0)
    def _():
        x_tile = xq_ref[0]                                          # (TQ, D)
        qT = jax.lax.dot_general(
            wq_ref[...].astype(cdt), x_tile.astype(cdt),
            (((1,), (1,)), ((), ())),
            preferred_element_type=jnp.float32)                     # (D, TQ)
        qT_ref[...] = qT + bq_ref[...]
        acc_ref[...] = jnp.zeros_like(acc_ref)

    # ---- per-head scaled dot-product attention (head = grid axis, no loop) ----
    # TODO(synk): the optional `mask` argument of the PyTorch forward is not
    # plumbed through (forward is exercised with mask=None).
    row = pl.multiple_of(h * head_dim, head_dim)
    q_hT = qT_ref[pl.ds(row, head_dim), :]                          # (hd, TQ)
    k_hT = kvT_ref[pl.ds(row, head_dim), :]                         # (hd, S)
    v_hT = kvT_ref[pl.ds(d_model + row, head_dim), :]               # (hd, S)

    energy = jax.lax.dot_general(                                   # (TQ, S)
        q_hT.astype(cdt), k_hT.astype(cdt),
        (((0,), (0,)), ((), ())),
        preferred_element_type=jnp.float32)
    m = jnp.max(energy, axis=-1, keepdims=True)
    p = jnp.exp(energy - m)
    inv_l = pl.reciprocal(jnp.sum(p, axis=-1, keepdims=True), approx=True)
    attn = p * inv_l                                                # softmax probs
    attn_ref[0, 0] = attn

    ctx_h = jax.lax.dot_general(                                    # (TQ, hd)
        attn.astype(cdt), v_hT.astype(cdt),
        (((1,), (1,)), ((), ())),
        preferred_element_type=jnp.float32)
    # output projection accumulated over heads (replaces the concat)
    acc_ref[...] += jnp.dot(ctx_h.astype(cdt), wo_ref[0].astype(cdt),
                            preferred_element_type=jnp.float32)

    # ---- last head: residual + LayerNorm1, FFN, residual + LayerNorm2 ----
    @pl.when(h == n_heads - 1)
    def _():
        x_tile = xq_ref[0]                                          # (TQ, D)
        attn_out = acc_ref[...] + bo_ref[...]
        y1 = _layer_norm(x_tile + attn_out, g1_ref[...], be1_ref[...])

        h1 = jnp.dot(y1.astype(cdt), w1_ref[...].astype(cdt),
                     preferred_element_type=jnp.float32) + b1_ref[...]
        h1 = jnp.maximum(h1, 0.0)
        ff = jnp.dot(h1.astype(cdt), w2_ref[...].astype(cdt),
                     preferred_element_type=jnp.float32) + b2_ref[...]
        y2 = _layer_norm(y1 + ff, g2_ref[...], be2_ref[...])
        out_ref[0] = y2.astype(out_ref.dtype)


def transformer_encoder_layer(x, params, *, n_heads, q_tile=None,
                              matmul_dtype=jnp.float32):
    B, S, D = x.shape
    assert D % n_heads == 0, "d_model must be divisible by n_heads"
    head_dim = D // n_heads
    d_ff = params["w1"].shape[1]

    TQ = q_tile or (S if S <= 128 else 128)
    assert S % TQ == 0, "seq length must be divisible by the query tile"
    n_qt = S // TQ

    # ---- host-side weight prep (pure layout + scale folding, no extra math) ----
    inv_scale = 1.0 / math.sqrt(head_dim)
    wq_t = params["wq"].T * inv_scale                       # (D_out, D_in), scaled
    bq_c = params["bq"].reshape(D, 1) * inv_scale           # (D, 1), scaled
    wkv_t = jnp.concatenate([params["wk"].T, params["wv"].T], axis=0)        # (2D, D)
    bkv_c = jnp.concatenate([params["bk"].reshape(D, 1),
                             params["bv"].reshape(D, 1)], axis=0)            # (2D, 1)
    wo_h = params["wo"].reshape(n_heads, head_dim, D)       # per-head output proj rows

    def const_spec(shape):
        nd = len(shape)
        return pl.BlockSpec(shape, lambda b, j, h, _n=nd: (0,) * _n)

    in_specs = [
        pl.BlockSpec((1, TQ, D), lambda b, j, h: (b, j, 0)),     # x, query tile
        pl.BlockSpec((1, S, D), lambda b, j, h: (b, 0, 0)),      # x, full seq (K/V src)
        const_spec((D, D)), const_spec((D, 1)),                  # Wq', bq'
        const_spec((2 * D, D)), const_spec((2 * D, 1)),          # Wkv, bkv
        pl.BlockSpec((1, head_dim, D), lambda b, j, h: (h, 0, 0)),  # Wo (per head)
        const_spec((1, D)),                                      # bo
        const_spec((D, d_ff)), const_spec((1, d_ff)),            # W1, b1
        const_spec((d_ff, D)), const_spec((1, D)),               # W2, b2
        const_spec((1, D)), const_spec((1, D)),                  # ln1 gamma/beta
        const_spec((1, D)), const_spec((1, D)),                  # ln2 gamma/beta
    ]
    out_specs = [
        pl.BlockSpec((1, TQ, D), lambda b, j, h: (b, j, 0)),
        pl.BlockSpec((1, 1, TQ, S), lambda b, j, h: (b, h, j, 0)),
    ]
    scratch_shapes = [
        pltpu.VMEM((2 * D, S), jnp.float32),    # [K;V]^T cache (per batch element)
        pltpu.VMEM((D, TQ), jnp.float32),       # Q^T cache (per query tile)
        pltpu.VMEM((TQ, D), jnp.float32),       # output-projection accumulator
    ]

    # vmem limit sized from the block footprint (double-buffered in/out + scratch),
    # with padding headroom; capped so it is valid on v7x (64 MiB physical).
    elems = (
        2 * (TQ * D + S * D)
        + 2 * (D * D + D + 2 * D * D + 2 * D + head_dim * D + D
               + D * d_ff + d_ff + d_ff * D + 5 * D)
        + 2 * (TQ * D + TQ * S)
        + (2 * D * S + D * TQ + TQ * D)
    )
    vmem_limit = int(max(16 << 20, min(2 * 4 * elems, 64 << 20)))

    kernel = functools.partial(
        encoder_layer_kernel,
        n_heads=n_heads, head_dim=head_dim, d_model=D, matmul_dtype=matmul_dtype,
    )
    # TODO(synk): for very large d_ff on v7x (64 MiB VMEM) add K-tiling of W1/W2.

    out, attn = pl.pallas_call(
        kernel,
        out_shape=(
            jax.ShapeDtypeStruct((B, S, D), jnp.float32),
            jax.ShapeDtypeStruct((B, n_heads, S, S), jnp.float32),
        ),
        grid_spec=pltpu.PrefetchScalarGridSpec(
            num_scalar_prefetch=0,
            grid=(B, n_qt, n_heads),
            in_specs=in_specs,
            out_specs=out_specs,
            scratch_shapes=scratch_shapes,
        ),
        compiler_params=pltpu.CompilerParams(
            dimension_semantics=("parallel", "arbitrary", "arbitrary"),
            vmem_limit_bytes=vmem_limit,
        ),
    )(
        x, x,
        wq_t, bq_c,
        wkv_t, bkv_c,
        wo_h, params["bo"],
        params["w1"], params["b1"],
        params["w2"], params["b2"],
        params["g1"], params["be1"],
        params["g2"], params["be2"],
    )
    return out, attn


def init_params(key, d_model, n_heads, d_ff):
    keys = jax.random.split(key, 12)
    s = 0.02

    def lin(kw, kb, din, dout):
        # stored as (in, out) so the math is y = x @ W + b
        w = s * jax.random.normal(kw, (din, dout), jnp.float32)
        b = s * jax.random.normal(kb, (1, dout), jnp.float32)
        return w, b

    wq, bq = lin(keys[0], keys[1], d_model, d_model)
    wk, bk = lin(keys[2], keys[3], d_model, d_model)
    wv, bv = lin(keys[4], keys[5], d_model, d_model)
    wo, bo = lin(keys[6], keys[7], d_model, d_model)
    w1, b1 = lin(keys[8], keys[9], d_model, d_ff)
    w2, b2 = lin(keys[10], keys[11], d_ff, d_model)

    return dict(
        wq=wq, bq=bq, wk=wk, bk=bk, wv=wv, bv=bv, wo=wo, bo=bo,
        w1=w1, b1=b1, w2=w2, b2=b2,
        g1=jnp.ones((1, d_model), jnp.float32),
        be1=jnp.zeros((1, d_model), jnp.float32),
        g2=jnp.ones((1, d_model), jnp.float32),
        be2=jnp.zeros((1, d_model), jnp.float32),
    )


def reference_forward(x, params, *, n_heads):
    """Pure-JAX reference mirroring the PyTorch module (eval mode)."""
    B, S, D = x.shape
    hd = D // n_heads
    with jax.default_matmul_precision("highest"):
        q = x @ params["wq"] + params["bq"]
        k = x @ params["wk"] + params["bk"]
        v = x @ params["wv"] + params["bv"]

        def split(t):
            return t.reshape(B, S, n_heads, hd).transpose(0, 2, 1, 3)

        qh, kh, vh = split(q), split(k), split(v)
        energy = jnp.einsum("bhqd,bhkd->bhqk", qh, kh) / math.sqrt(hd)
        attn = jax.nn.softmax(energy, axis=-1)
        ctx = jnp.einsum("bhqk,bhkd->bhqd", attn, vh)
        ctx = ctx.transpose(0, 2, 1, 3).reshape(B, S, D)
        attn_out = ctx @ params["wo"] + params["bo"]

        def ln(t, g, b):
            mu = t.mean(-1, keepdims=True)
            var = ((t - mu) ** 2).mean(-1, keepdims=True)
            return (t - mu) * jax.lax.rsqrt(var + 1e-5) * g + b

        y1 = ln(x + attn_out, params["g1"], params["be1"])
        ff = jnp.maximum(y1 @ params["w1"] + params["b1"], 0.0) @ params["w2"] + params["b2"]
        y2 = ln(y1 + ff, params["g2"], params["be2"])
    return y2, attn


if __name__ == "__main__":
    B, S, d_model, n_heads, d_ff = 2, 8, 32, 4, 64

    key = jax.random.PRNGKey(0)
    kx, kp = jax.random.split(key)
    x = jax.random.normal(kx, (B, S, d_model), jnp.float32)
    params = init_params(kp, d_model, n_heads, d_ff)

    out, attn = transformer_encoder_layer(x, params, n_heads=n_heads)
    jax.block_until_ready((out, attn))

    assert out.shape == (B, S, d_model)
    assert attn.shape == (B, n_heads, S, S)

    ref_out, ref_attn = reference_forward(x, params, n_heads=n_heads)
    assert jnp.allclose(out, ref_out, atol=2e-2, rtol=2e-2), "output mismatch vs reference"
    assert jnp.allclose(attn, ref_attn, atol=2e-2, rtol=2e-2), "attention mismatch vs reference"

    print("KERNEL_OK")
</pallas_src>

<mosaic_0001>
module attributes {stable_mosaic.version = 11 : i64} {
  func.func @encoder_layer_kernel(%arg0: i32, %arg1: i32, %arg2: i32, %arg3: memref<1x8x32xf32, #tpu.memory_space<vmem>>, %arg4: memref<1x8x32xf32, #tpu.memory_space<vmem>>, %arg5: memref<32x32xf32, #tpu.memory_space<vmem>>, %arg6: memref<32x1xf32, #tpu.memory_space<vmem>>, %arg7: memref<64x32xf32, #tpu.memory_space<vmem>>, %arg8: memref<64x1xf32, #tpu.memory_space<vmem>>, %arg9: memref<1x8x32xf32, #tpu.memory_space<vmem>>, %arg10: memref<1x32xf32, #tpu.memory_space<vmem>>, %arg11: memref<32x64xf32, #tpu.memory_space<vmem>>, %arg12: memref<1x64xf32, #tpu.memory_space<vmem>>, %arg13: memref<64x32xf32, #tpu.memory_space<vmem>>, %arg14: memref<1x32xf32, #tpu.memory_space<vmem>>, %arg15: memref<1x32xf32, #tpu.memory_space<vmem>>, %arg16: memref<1x32xf32, #tpu.memory_space<vmem>>, %arg17: memref<1x32xf32, #tpu.memory_space<vmem>>, %arg18: memref<1x32xf32, #tpu.memory_space<vmem>>, %arg19: memref<1x8x32xf32, #tpu.memory_space<vmem>>, %arg20: memref<1x1x8x8xf32, #tpu.memory_space<vmem>>, %arg21: memref<64x8xf32, #tpu.memory_space<vmem>>, %arg22: memref<32x8xf32, #tpu.memory_space<vmem>>, %arg23: memref<8x32xf32, #tpu.memory_space<vmem>>) attributes {dimension_semantics = [#tpu.dimension_semantics<parallel>, #tpu.dimension_semantics<arbitrary>, #tpu.dimension_semantics<arbitrary>], iteration_bounds = array<i64: 2, 1, 4>, scalar_prefetch = 0 : i64, scratch_operands = 3 : i64, tpu.core_type = #tpu.core_type<tc>, window_params = [{transform_indices = @transform_0, window_bounds = array<i64: 1, 8, 32>}, {transform_indices = @transform_1, window_bounds = array<i64: 1, 8, 32>}, {pipeline_mode = #tpu.pipeline_mode<synchronous>, transform_indices = @transform_2, window_bounds = array<i64: 32, 32>}, {pipeline_mode = #tpu.pipeline_mode<synchronous>, transform_indices = @transform_3, window_bounds = array<i64: 32, 1>}, {pipeline_mode = #tpu.pipeline_mode<synchronous>, transform_indices = @transform_4, window_bounds = array<i64: 64, 32>}, {pipeline_mode = #tpu.pipeline_mode<synchronous>, transform_indices = @transform_5, window_bounds = array<i64: 64, 1>}, {transform_indices = @transform_6, window_bounds = array<i64: 1, 8, 32>}, {pipeline_mode = #tpu.pipeline_mode<synchronous>, transform_indices = @transform_7, window_bounds = array<i64: 1, 32>}, {pipeline_mode = #tpu.pipeline_mode<synchronous>, transform_indices = @transform_8, window_bounds = array<i64: 32, 64>}, {pipeline_mode = #tpu.pipeline_mode<synchronous>, transform_indices = @transform_9, window_bounds = array<i64: 1, 64>}, {pipeline_mode = #tpu.pipeline_mode<synchronous>, transform_indices = @transform_10, window_bounds = array<i64: 64, 32>}, {pipeline_mode = #tpu.pipeline_mode<synchronous>, transform_indices = @transform_11, window_bounds = array<i64: 1, 32>}, {pipeline_mode = #tpu.pipeline_mode<synchronous>, transform_indices = @transform_12, window_bounds = array<i64: 1, 32>}, {pipeline_mode = #tpu.pipeline_mode<synchronous>, transform_indices = @transform_13, window_bounds = array<i64: 1, 32>}, {pipeline_mode = #tpu.pipeline_mode<synchronous>, transform_indices = @transform_14, window_bounds = array<i64: 1, 32>}, {pipeline_mode = #tpu.pipeline_mode<synchronous>, transform_indices = @transform_15, window_bounds = array<i64: 1, 32>}, {transform_indices = @transform_16, window_bounds = array<i64: 1, 8, 32>}, {transform_indices = @transform_17, window_bounds = array<i64: 1, 1, 8, 8>}]} {
    %c0_i32 = arith.constant 0 : i32
    %0 = arith.cmpi eq, %arg1, %c0_i32 : i32
    %c0_i32_0 = arith.constant 0 : i32
    %1 = arith.cmpi eq, %arg2, %c0_i32_0 : i32
    %2 = arith.andi %0, %1 : i1
    %3 = arith.extui %2 : i1 to i32
    %c0_i32_1 = arith.constant 0 : i32
    %4 = arith.cmpi ne, %3, %c0_i32_1 : i32
    scf.if %4 {
      %c0_22 = arith.constant 0 : index
      %c0_23 = arith.constant 0 : index
      %c0_24 = arith.constant 0 : index
      %41 = vector.load %arg4[%c0_22, %c0_23, %c0_24] : memref<1x8x32xf32, #tpu.memory_space<vmem>>, vector<1x8x32xf32>
      %42 = vector.shape_cast %41 : vector<1x8x32xf32> to vector<8x32xf32>
      %c0_25 = arith.constant 0 : index
      %c0_26 = arith.constant 0 : index
      %43 = vector.load %arg7[%c0_25, %c0_26] : memref<64x32xf32, #tpu.memory_space<vmem>>, vector<64x32xf32>
      %cst_27 = arith.constant dense<0.000000e+00> : vector<64x8xf32>
      %44 = tpu.matmul %43, %42, %cst_27 {dimension_numbers = #tpu.dot_dimension_numbers<[1], [1], [0], [0], [0, 0, 1, 0], [], []>} : vector<64x32xf32>, vector<8x32xf32>, vector<64x8xf32> -> vector<64x8xf32>
      %c0_28 = arith.constant 0 : index
      %c0_29 = arith.constant 0 : index
      %45 = vector.load %arg8[%c0_28, %c0_29] : memref<64x1xf32, #tpu.memory_space<vmem>>, vector<64x1xf32>
      %46 = vector.broadcast %45 : vector<64x1xf32> to vector<64x8xf32>
      %47 = arith.addf %44, %46 : vector<64x8xf32>
      %c0_30 = arith.constant 0 : index
      %c0_31 = arith.constant 0 : index
      %48 = vector.load %arg21[%c0_30, %c0_31] : memref<64x8xf32, #tpu.memory_space<vmem>>, vector<64x8xf32>
      tpu.vector_store %arg21[%c0_30, %c0_31], %47 {strides = array<i32>} : memref<64x8xf32, #tpu.memory_space<vmem>>, vector<64x8xf32>,
    } else {
    }
    %c0_i32_2 = arith.constant 0 : i32
    %5 = arith.cmpi eq, %arg2, %c0_i32_2 : i32
    %6 = arith.extui %5 : i1 to i32
    %c0_i32_3 = arith.constant 0 : i32
    %7 = arith.cmpi ne, %6, %c0_i32_3 : i32
    scf.if %7 {
      %c0_22 = arith.constant 0 : index
      %c0_23 = arith.constant 0 : index
      %c0_24 = arith.constant 0 : index
      %41 = vector.load %arg3[%c0_22, %c0_23, %c0_24] : memref<1x8x32xf32, #tpu.memory_space<vmem>>, vector<1x8x32xf32>
      %42 = vector.shape_cast %41 : vector<1x8x32xf32> to vector<8x32xf32>
      %c0_25 = arith.constant 0 : index
      %c0_26 = arith.constant 0 : index
      %43 = vector.load %arg5[%c0_25, %c0_26] : memref<32x32xf32, #tpu.memory_space<vmem>>, vector<32x32xf32>
      %cst_27 = arith.constant dense<0.000000e+00> : vector<32x8xf32>
      %44 = tpu.matmul %43, %42, %cst_27 {dimension_numbers = #tpu.dot_dimension_numbers<[1], [1], [0], [0], [0, 0, 1, 0], [], []>} : vector<32x32xf32>, vector<8x32xf32>, vector<32x8xf32> -> vector<32x8xf32>
      %c0_28 = arith.constant 0 : index
      %c0_29 = arith.constant 0 : index
      %45 = vector.load %arg6[%c0_28, %c0_29] : memref<32x1xf32, #tpu.memory_space<vmem>>, vector<32x1xf32>
      %46 = vector.broadcast %45 : vector<32x1xf32> to vector<32x8xf32>
      %47 = arith.addf %44, %46 : vector<32x8xf32>
      %c0_30 = arith.constant 0 : index
      %c0_31 = arith.constant 0 : index
      %48 = vector.load %arg22[%c0_30, %c0_31] : memref<32x8xf32, #tpu.memory_space<vmem>>, vector<32x8xf32>
      tpu.vector_store %arg22[%c0_30, %c0_31], %47 {strides = array<i32>} : memref<32x8xf32, #tpu.memory_space<vmem>>, vector<32x8xf32>,
      %cst_32 = arith.constant 0.000000e+00 : f32
      %49 = vector.broadcast %cst_32 : f32 to vector<8x32xf32>
      %c0_33 = arith.constant 0 : index
      %c0_34 = arith.constant 0 : index
      %50 = vector.load %arg23[%c0_33, %c0_34] : memref<8x32xf32, #tpu.memory_space<vmem>>, vector<8x32xf32>
      tpu.vector_store %arg23[%c0_33, %c0_34], %49 {strides = array<i32>} : memref<8x32xf32, #tpu.memory_space<vmem>>, vector<8x32xf32>,
    } else {
    }
    %c8_i32 = arith.constant 8 : i32
    %8 = arith.muli %arg2, %c8_i32 : i32
    %9 = tpu.assume_multiple %8, 8 : i32
    %10 = arith.index_cast %9 : i32 to index
    %c0 = arith.constant 0 : index
    %11 = vector.load %arg22[%10, %c0] : memref<32x8xf32, #tpu.memory_space<vmem>>, vector<8x8xf32>
    %12 = arith.index_cast %9 : i32 to index
    %c0_4 = arith.constant 0 : index
    %13 = vector.load %arg21[%12, %c0_4] : memref<64x8xf32, #tpu.memory_space<vmem>>, vector<8x8xf32>
    %c32_i32 = arith.constant 32 : i32
    %14 = arith.addi %c32_i32, %9 : i32
    %15 = arith.index_cast %14 : i32 to index
    %c0_5 = arith.constant 0 : index
    %16 = vector.load %arg21[%15, %c0_5] : memref<64x8xf32, #tpu.memory_space<vmem>>, vector<8x8xf32>
    %cst = arith.constant dense<0.000000e+00> : vector<8x8xf32>
    %17 = tpu.matmul %11, %13, %cst {dimension_numbers = #tpu.dot_dimension_numbers<[0], [0], [1], [1], [0, 1, 1, 1], [], []>} : vector<8x8xf32>, vector<8x8xf32>, vector<8x8xf32> -> vector<8x8xf32>
    %cst_6 = arith.constant dense<0xFF800000> : vector<8xf32>
    %18 = vector.multi_reduction <maximumf>, %17, %cst_6 [1] : vector<8x8xf32> to vector<8xf32>
    %19 = vector.shape_cast %18 : vector<8xf32> to vector<8x1xf32>
    %20 = vector.broadcast %19 : vector<8x1xf32> to vector<8x8xf32>
    %21 = arith.subf %17, %20 : vector<8x8xf32>
    %22 = math.exp %21 : vector<8x8xf32>
    %cst_7 = arith.constant dense<0.000000e+00> : vector<8xf32>
    %23 = vector.multi_reduction <add>, %22, %cst_7 [1] : vector<8x8xf32> to vector<8xf32>
    %24 = vector.shape_cast %23 : vector<8xf32> to vector<8x1xf32>
    %25 = tpu.reciprocal %24 {approx = true} : vector<8x1xf32> -> vector<8x1xf32>
    %26 = vector.broadcast %25 : vector<8x1xf32> to vector<8x8xf32>
    %27 = arith.mulf %22, %26 : vector<8x8xf32>
    %c0_8 = arith.constant 0 : index
    %c0_9 = arith.constant 0 : index
    %c0_10 = arith.constant 0 : index
    %c0_11 = arith.constant 0 : index
    %28 = vector.load %arg20[%c0_8, %c0_9, %c0_10, %c0_11] : memref<1x1x8x8xf32, #tpu.memory_space<vmem>>, vector<1x1x8x8xf32>
    %29 = vector.shape_cast %28 : vector<1x1x8x8xf32> to vector<8x8xf32>
    %30 = vector.shape_cast %27 : vector<8x8xf32> to vector<1x1x8x8xf32>
    tpu.vector_store %arg20[%c0_8, %c0_9, %c0_10, %c0_11], %30 {strides = array<i32>} : memref<1x1x8x8xf32, #tpu.memory_space<vmem>>, vector<1x1x8x8xf32>,
    %cst_12 = arith.constant dense<0.000000e+00> : vector<8x8xf32>
    %31 = tpu.matmul %27, %16, %cst_12 {dimension_numbers = #tpu.dot_dimension_numbers<[1], [1], [0], [0], [0, 0, 1, 0], [], []>} : vector<8x8xf32>, vector<8x8xf32>, vector<8x8xf32> -> vector<8x8xf32>
    %c0_13 = arith.constant 0 : index
    %c0_14 = arith.constant 0 : index
    %32 = vector.load %arg23[%c0_13, %c0_14] : memref<8x32xf32, #tpu.memory_space<vmem>>, vector<8x32xf32>
    %c0_15 = arith.constant 0 : index
    %c0_16 = arith.constant 0 : index
    %c0_17 = arith.constant 0 : index
    %33 = vector.load %arg9[%c0_15, %c0_16, %c0_17] : memref<1x8x32xf32, #tpu.memory_space<vmem>>, vector<1x8x32xf32>
    %34 = vector.shape_cast %33 : vector<1x8x32xf32> to vector<8x32xf32>
    %cst_18 = arith.constant dense<0.000000e+00> : vector<8x32xf32>
    %35 = tpu.matmul %31, %34, %cst_18 {dimension_numbers = #tpu.dot_dimension_numbers<[1], [0], [0], [1], [0, 0, 1, 1], [], []>} : vector<8x8xf32>, vector<8x32xf32>, vector<8x32xf32> -> vector<8x32xf32>
    %36 = arith.addf %32, %35 : vector<8x32xf32>
    %c0_19 = arith.constant 0 : index
    %c0_20 = arith.constant 0 : index
    %37 = vector.load %arg23[%c0_19, %c0_20] : memref<8x32xf32, #tpu.memory_space<vmem>>, vector<8x32xf32>
    tpu.vector_store %arg23[%c0_19, %c0_20], %36 {strides = array<i32>} : memref<8x32xf32, #tpu.memory_space<vmem>>, vector<8x32xf32>,
    %c3_i32 = arith.constant 3 : i32
    %38 = arith.cmpi eq, %arg2, %c3_i32 : i32
    %39 = arith.extui %38 : i1 to i32
    %c0_i32_21 = arith.constant 0 : i32
    %40 = arith.cmpi ne, %39, %c0_i32_21 : i32
    scf.if %40 {
      %c0_22 = arith.constant 0 : index
      %c0_23 = arith.constant 0 : index
      %c0_24 = arith.constant 0 : index
      %41 = vector.load %arg3[%c0_22, %c0_23, %c0_24] : memref<1x8x32xf32, #tpu.memory_space<vmem>>, vector<1x8x32xf32>
      %42 = vector.shape_cast %41 : vector<1x8x32xf32> to vector<8x32xf32>
      %c0_25 = arith.constant 0 : index
      %c0_26 = arith.constant 0 : index
      %43 = vector.load %arg23[%c0_25, %c0_26] : memref<8x32xf32, #tpu.memory_space<vmem>>, vector<8x32xf32>
      %c0_27 = arith.constant 0 : index
      %c0_28 = arith.constant 0 : index
      %44 = vector.load %arg10[%c0_27, %c0_28] : memref<1x32xf32, #tpu.memory_space<vmem>>, vector<1x32xf32>
      %45 = vector.broadcast %44 : vector<1x32xf32> to vector<8x32xf32>
      %46 = arith.addf %43, %45 : vector<8x32xf32>
      %47 = arith.addf %42, %46 : vector<8x32xf32>
      %c0_29 = arith.constant 0 : index
      %c0_30 = arith.constant 0 : index
      %48 = vector.load %arg15[%c0_29, %c0_30] : memref<1x32xf32, #tpu.memory_space<vmem>>, vector<1x32xf32>
      %c0_31 = arith.constant 0 : index
      %c0_32 = arith.constant 0 : index
      %49 = vector.load %arg16[%c0_31, %c0_32] : memref<1x32xf32, #tpu.memory_space<vmem>>, vector<1x32xf32>
      %cst_33 = arith.constant dense<0.000000e+00> : vector<8xf32>
      %50 = vector.multi_reduction <add>, %47, %cst_33 [1] : vector<8x32xf32> to vector<8xf32>
      %51 = vector.shape_cast %50 : vector<8xf32> to vector<8x1xf32>
      %cst_34 = arith.constant 3.200000e+01 : f32
      %52 = vector.broadcast %cst_34 : f32 to vector<8x1xf32>
      %53 = arith.divf %51, %52 : vector<8x1xf32>
      %54 = vector.broadcast %53 : vector<8x1xf32> to vector<8x32xf32>
      %55 = arith.subf %47, %54 : vector<8x32xf32>
      %56 = arith.mulf %55, %55 : vector<8x32xf32>
      %cst_35 = arith.constant dense<0.000000e+00> : vector<8xf32>
      %57 = vector.multi_reduction <add>, %56, %cst_35 [1] : vector<8x32xf32> to vector<8xf32>
      %58 = vector.shape_cast %57 : vector<8xf32> to vector<8x1xf32>
      %cst_36 = arith.constant 3.200000e+01 : f32
      %59 = vector.broadcast %cst_36 : f32 to vector<8x1xf32>
      %60 = arith.divf %58, %59 : vector<8x1xf32>
      %61 = vector.broadcast %53 : vector<8x1xf32> to vector<8x32xf32>
      %62 = arith.subf %47, %61 : vector<8x32xf32>
      %cst_37 = arith.constant 9.99999974E-6 : f32
      %63 = vector.broadcast %cst_37 : f32 to vector<8x1xf32>
      %64 = arith.addf %60, %63 : vector<8x1xf32>
      %65 = math.rsqrt %64 : vector<8x1xf32>
      %66 = vector.broadcast %65 : vector<8x1xf32> to vector<8x32xf32>
      %67 = arith.mulf %62, %66 : vector<8x32xf32>
      %68 = vector.broadcast %48 : vector<1x32xf32> to vector<8x32xf32>
      %69 = arith.mulf %67, %68 : vector<8x32xf32>
      %70 = vector.broadcast %49 : vector<1x32xf32> to vector<8x32xf32>
      %71 = arith.addf %69, %70 : vector<8x32xf32>
      %c0_38 = arith.constant 0 : index
      %c0_39 = arith.constant 0 : index
      %72 = vector.load %arg11[%c0_38, %c0_39] : memref<32x64xf32, #tpu.memory_space<vmem>>, vector<32x64xf32>
      %cst_40 = arith.constant dense<0.000000e+00> : vector<8x64xf32>
      %73 = tpu.matmul %71, %72, %cst_40 {dimension_numbers = #tpu.dot_dimension_numbers<[1], [0], [0], [1], [0, 0, 1, 1], [], []>} : vector<8x32xf32>, vector<32x64xf32>, vector<8x64xf32> -> vector<8x64xf32>
      %c0_41 = arith.constant 0 : index
      %c0_42 = arith.constant 0 : index
      %74 = vector.load %arg12[%c0_41, %c0_42] : memref<1x64xf32, #tpu.memory_space<vmem>>, vector<1x64xf32>
      %75 = vector.broadcast %74 : vector<1x64xf32> to vector<8x64xf32>
      %76 = arith.addf %73, %75 : vector<8x64xf32>
      %cst_43 = arith.constant 0.000000e+00 : f32
      %77 = vector.broadcast %cst_43 : f32 to vector<8x64xf32>
      %78 = arith.maximumf %76, %77 : vector<8x64xf32>
      %c0_44 = arith.constant 0 : index
      %c0_45 = arith.constant 0 : index
      %79 = vector.load %arg13[%c0_44, %c0_45] : memref<64x32xf32, #tpu.memory_space<vmem>>, vector<64x32xf32>
      %cst_46 = arith.constant dense<0.000000e+00> : vector<8x32xf32>
      %80 = tpu.matmul %78, %79, %cst_46 {dimension_numbers = #tpu.dot_dimension_numbers<[1], [0], [0], [1], [0, 0, 1, 1], [], []>} : vector<8x64xf32>, vector<64x32xf32>, vector<8x32xf32> -> vector<8x32xf32>
      %c0_47 = arith.constant 0 : index
      %c0_48 = arith.constant 0 : index
      %81 = vector.load %arg14[%c0_47, %c0_48] : memref<1x32xf32, #tpu.memory_space<vmem>>, vector<1x32xf32>
      %82 = vector.broadcast %81 : vector<1x32xf32> to vector<8x32xf32>
      %83 = arith.addf %80, %82 : vector<8x32xf32>
      %84 = arith.addf %71, %83 : vector<8x32xf32>
      %c0_49 = arith.constant 0 : index
      %c0_50 = arith.constant 0 : index
      %85 = vector.load %arg17[%c0_49, %c0_50] : memref<1x32xf32, #tpu.memory_space<vmem>>, vector<1x32xf32>
      %c0_51 = arith.constant 0 : index
      %c0_52 = arith.constant 0 : index
      %86 = vector.load %arg18[%c0_51, %c0_52] : memref<1x32xf32, #tpu.memory_space<vmem>>, vector<1x32xf32>
      %cst_53 = arith.constant dense<0.000000e+00> : vector<8xf32>
      %87 = vector.multi_reduction <add>, %84, %cst_53 [1] : vector<8x32xf32> to vector<8xf32>
      %88 = vector.shape_cast %87 : vector<8xf32> to vector<8x1xf32>
      %cst_54 = arith.constant 3.200000e+01 : f32
      %89 = vector.broadcast %cst_54 : f32 to vector<8x1xf32>
      %90 = arith.divf %88, %89 : vector<8x1xf32>
      %91 = vector.broadcast %90 : vector<8x1xf32> to vector<8x32xf32>
      %92 = arith.subf %84, %91 : vector<8x32xf32>
      %93 = arith.mulf %92, %92 : vector<8x32xf32>
      %cst_55 = arith.constant dense<0.000000e+00> : vector<8xf32>
      %94 = vector.multi_reduction <add>, %93, %cst_55 [1] : vector<8x32xf32> to vector<8xf32>
      %95 = vector.shape_cast %94 : vector<8xf32> to vector<8x1xf32>
      %cst_56 = arith.constant 3.200000e+01 : f32
      %96 = vector.broadcast %cst_56 : f32 to vector<8x1xf32>
      %97 = arith.divf %95, %96 : vector<8x1xf32>
      %98 = vector.broadcast %90 : vector<8x1xf32> to vector<8x32xf32>
      %99 = arith.subf %84, %98 : vector<8x32xf32>
      %cst_57 = arith.constant 9.99999974E-6 : f32
      %100 = vector.broadcast %cst_57 : f32 to vector<8x1xf32>
      %101 = arith.addf %97, %100 : vector<8x1xf32>
      %102 = math.rsqrt %101 : vector<8x1xf32>
      %103 = vector.broadcast %102 : vector<8x1xf32> to vector<8x32xf32>
      %104 = arith.mulf %99, %103 : vector<8x32xf32>
      %105 = vector.broadcast %85 : vector<1x32xf32> to vector<8x32xf32>
      %106 = arith.mulf %104, %105 : vector<8x32xf32>
      %107 = vector.broadcast %86 : vector<1x32xf32> to vector<8x32xf32>
      %108 = arith.addf %106, %107 : vector<8x32xf32>
      %c0_58 = arith.constant 0 : index
      %c0_59 = arith.constant 0 : index
      %c0_60 = arith.constant 0 : index
      %109 = vector.load %arg19[%c0_58, %c0_59, %c0_60] : memref<1x8x32xf32, #tpu.memory_space<vmem>>, vector<1x8x32xf32>
      %110 = vector.shape_cast %109 : vector<1x8x32xf32> to vector<8x32xf32>
      %111 = vector.shape_cast %108 : vector<8x32xf32> to vector<1x8x32xf32>
      tpu.vector_store %arg19[%c0_58, %c0_59, %c0_60], %111 {strides = array<i32>} : memref<1x8x32xf32, #tpu.memory_space<vmem>>, vector<1x8x32xf32>,
    } else {
    }
    return
  }
  func.func @transform_0(%arg0: i32, %arg1: i32, %arg2: i32) -> (i32, i32, i32) {
    %c0_i32 = arith.constant 0 : i32
    %c0_i32_0 = arith.constant 0 : i32
    return %arg0, %arg1, %c0_i32 : i32, i32, i32
  }
  func.func @transform_1(%arg0: i32, %arg1: i32, %arg2: i32) -> (i32, i32, i32) {
    %c0_i32 = arith.constant 0 : i32
    %c0_i32_0 = arith.constant 0 : i32
    %c0_i32_1 = arith.constant 0 : i32
    return %arg0, %c0_i32, %c0_i32_0 : i32, i32, i32
  }
  func.func @transform_2(%arg0: i32, %arg1: i32, %arg2: i32) -> (i32, i32) {
    %c0_i32 = arith.constant 0 : i32
    %c0_i32_0 = arith.constant 0 : i32
    %c0_i32_1 = arith.constant 0 : i32
    return %c0_i32, %c0_i32_0 : i32, i32
  }
  func.func @transform_3(%arg0: i32, %arg1: i32, %arg2: i32) -> (i32, i32) {
    %c0_i32 = arith.constant 0 : i32
    %c0_i32_0 = arith.constant 0 : i32
    %c0_i32_1 = arith.constant 0 : i32
    return %c0_i32, %c0_i32_0 : i32, i32
  }
  func.func @transform_4(%arg0: i32, %arg1: i32, %arg2: i32) -> (i32, i32) {
    %c0_i32 = arith.constant 0 : i32
    %c0_i32_0 = arith.constant 0 : i32
    %c0_i32_1 = arith.constant 0 : i32
    return %c0_i32, %c0_i32_0 : i32, i32
  }
  func.func @transform_5(%arg0: i32, %arg1: i32, %arg2: i32) -> (i32, i32) {
    %c0_i32 = arith.constant 0 : i32
    %c0_i32_0 = arith.constant 0 : i32
    %c0_i32_1 = arith.constant 0 : i32
    return %c0_i32, %c0_i32_0 : i32, i32
  }
  func.func @transform_6(%arg0: i32, %arg1: i32, %arg2: i32) -> (i32, i32, i32) {
    %c0_i32 = arith.constant 0 : i32
    %c0_i32_0 = arith.constant 0 : i32
    %c0_i32_1 = arith.constant 0 : i32
    return %arg2, %c0_i32, %c0_i32_0 : i32, i32, i32
  }
  func.func @transform_7(%arg0: i32, %arg1: i32, %arg2: i32) -> (i32, i32) {
    %c0_i32 = arith.constant 0 : i32
    %c0_i32_0 = arith.constant 0 : i32
    %c0_i32_1 = arith.constant 0 : i32
    return %c0_i32, %c0_i32_0 : i32, i32
  }
  func.func @transform_8(%arg0: i32, %arg1: i32, %arg2: i32) -> (i32, i32) {
    %c0_i32 = arith.constant 0 : i32
    %c0_i32_0 = arith.constant 0 : i32
    %c0_i32_1 = arith.constant 0 : i32
    return %c0_i32, %c0_i32_0 : i32, i32
  }
  func.func @transform_9(%arg0: i32, %arg1: i32, %arg2: i32) -> (i32, i32) {
    %c0_i32 = arith.constant 0 : i32
    %c0_i32_0 = arith.constant 0 : i32
    %c0_i32_1 = arith.constant 0 : i32
    return %c0_i32, %c0_i32_0 : i32, i32
  }
  func.func @transform_10(%arg0: i32, %arg1: i32, %arg2: i32) -> (i32, i32) {
    %c0_i32 = arith.constant 0 : i32
    %c0_i32_0 = arith.constant 0 : i32
    %c0_i32_1 = arith.constant 0 : i32
    return %c0_i32, %c0_i32_0 : i32, i32
  }
  func.func @transform_11(%arg0: i32, %arg1: i32, %arg2: i32) -> (i32, i32) {
    %c0_i32 = arith.constant 0 : i32
    %c0_i32_0 = arith.constant 0 : i32
    %c0_i32_1 = arith.constant 0 : i32
    return %c0_i32, %c0_i32_0 : i32, i32
  }
  func.func @transform_12(%arg0: i32, %arg1: i32, %arg2: i32) -> (i32, i32) {
    %c0_i32 = arith.constant 0 : i32
    %c0_i32_0 = arith.constant 0 : i32
    %c0_i32_1 = arith.constant 0 : i32
    return %c0_i32, %c0_i32_0 : i32, i32
  }
  func.func @transform_13(%arg0: i32, %arg1: i32, %arg2: i32) -> (i32, i32) {
    %c0_i32 = arith.constant 0 : i32
    %c0_i32_0 = arith.constant 0 : i32
    %c0_i32_1 = arith.constant 0 : i32
    return %c0_i32, %c0_i32_0 : i32, i32
  }
  func.func @transform_14(%arg0: i32, %arg1: i32, %arg2: i32) -> (i32, i32) {
    %c0_i32 = arith.constant 0 : i32
    %c0_i32_0 = arith.constant 0 : i32
    %c0_i32_1 = arith.constant 0 : i32
    return %c0_i32, %c0_i32_0 : i32, i32
  }
  func.func @transform_15(%arg0: i32, %arg1: i32, %arg2: i32) -> (i32, i32) {
    %c0_i32 = arith.constant 0 : i32
    %c0_i32_0 = arith.constant 0 : i32
    %c0_i32_1 = arith.constant 0 : i32
    return %c0_i32, %c0_i32_0 : i32, i32
  }
  func.func @transform_16(%arg0: i32, %arg1: i32, %arg2: i32) -> (i32, i32, i32) {
    %c0_i32 = arith.constant 0 : i32
    %c0_i32_0 = arith.constant 0 : i32
    return %arg0, %arg1, %c0_i32 : i32, i32, i32
  }
  func.func @transform_17(%arg0: i32, %arg1: i32, %arg2: i32) -> (i32, i32, i32, i32) {
    %c0_i32 = arith.constant 0 : i32
    %c0_i32_0 = arith.constant 0 : i32
    return %arg0, %arg2, %arg1, %c0_i32 : i32, i32, i32, i32
  }
}

</mosaic_0001>

<llo_original>
// kernel: tpu_custom_call.1
$region0: #{tpu_custom_call.1}
  #allocation0 [shape = 'u32[]', space=smem, size = 0x4, offset = 0x4, fixed_abs, tag = 'smem constant byte address 0x4 - core index']
  #allocation1 [shape = 'u32[72,128]{1,0:T(1,128)}', space=vmem, size = 0x9000, scoped, tag = 'internal scratch']
  #allocation2 [shape = 'f32[64,8]{1,0:T(8,128)}', space=vmem, size = 0x8000, scoped, tag = 'scratch operand']
  #allocation3 [shape = 'f32[32,8]{1,0:T(8,128)}', space=vmem, size = 0x4000, scoped, tag = 'scratch operand']
  #allocation4 [shape = 'f32[8,32]{1,0:T(8,128)}', space=vmem, size = 0x1000, scoped, tag = 'scratch operand']
  %s0 = inlined_call_operand.vmem [shape: f32[2,8,32], index: 0, kind: input, shape index: {}]
  %s1 = inlined_call_operand.vmem [shape: f32[2,8,32], index: 1, kind: input, shape index: {}]
  %s2 = inlined_call_operand.vmem [shape: f32[32,32], index: 2, kind: input, shape index: {}]
  %s3 = inlined_call_operand.vmem [shape: f32[32,1], index: 3, kind: input, shape index: {}]
  %s4 = inlined_call_operand.vmem [shape: f32[64,32], index: 4, kind: input, shape index: {}]
  %s5 = inlined_call_operand.vmem [shape: f32[64,1], index: 5, kind: input, shape index: {}]
  %s6 = inlined_call_operand.vmem [shape: f32[4,8,32], index: 6, kind: input, shape index: {}]
  %s7 = inlined_call_operand.vmem [shape: f32[1,32], index: 7, kind: input, shape index: {}]
  %s8 = inlined_call_operand.vmem [shape: f32[32,64], index: 8, kind: input, shape index: {}]
  %s9 = inlined_call_operand.vmem [shape: f32[1,64], index: 9, kind: input, shape index: {}]
  %s10 = inlined_call_operand.vmem [shape: f32[64,32], index: 10, kind: input, shape index: {}]
  %s11 = inlined_call_operand.vmem [shape: f32[1,32], index: 11, kind: input, shape index: {}]
  %s12 = inlined_call_operand.vmem [shape: f32[1,32], index: 12, kind: input, shape index: {}]
  %s13 = inlined_call_operand.vmem [shape: f32[1,32], index: 13, kind: input, shape index: {}]
  %s14 = inlined_call_operand.vmem [shape: f32[1,32], index: 14, kind: input, shape index: {}]
  %s15 = inlined_call_operand.vmem [shape: f32[1,32], index: 15, kind: input, shape index: {}]
  %s16 = inlined_call_operand.hbm [shape: f32[2,8,32], index: 16, kind: output, shape index: {0}]
  %s17 = inlined_call_operand.hbm [shape: f32[2,4,8,8], index: 17, kind: output, shape index: {1}]
  %18 = xla_tuple %s16, %s17
  %s19 = sld [smem:[#allocation0]]
  $region117: #{tpu_custom_call.1} parent=0
    _
  %s21 = ssub.s32 1, %s19
  %s22 = scalar_select 0, %s21, %s19
  $region1: #{tpu_custom_call.1} parent=0
    #allocation5 [shape = 'u8[8192]{0}', space=vmem, size = 0x2000, scoped, tag = 'output window, operand 0']
    #allocation6 [shape = 's32[2]{0}', space=sflag, size = 0x8, scoped, tag = 'scoped memory for tpu_custom_call.1']
    #allocation7 [shape = 'u8[8192]{0}', space=vmem, size = 0x2000, scoped, tag = 'output window, operand 1']
    #allocation8 [shape = 's32[2]{0}', space=sflag, size = 0x8, scoped, tag = 'scoped memory for tpu_custom_call.1']
    %23 = vsyncpa [#allocation6], 0
    %s24 = scalar_lea.sflag [#allocation6], 1
    %25 = vsyncpa %s24, 0
    %26 = vsyncpa [#allocation8], 0
    %s27 = scalar_lea.sflag [#allocation8], 1
    %28 = vsyncpa %s27, 0
    loop: start=0, step=1, limit=10
    $region2: #{tpu_custom_call.1} parent=1 // loop_pre_header
      _
    $region3: #{tpu_custom_call.1} parent=1 // loop_header
      %s30 = sphi 0, %s34
      %p31 = scmp.ge.s32.totalorder %s30, 10
      %s37 = sphi 0, %s56
      %s38 = sphi 0, %s52
      %s39 = sphi 0, %s48
      %s40 = sphi 0, %s37
      %s41 = sphi 0, %s38
      %s42 = sphi 0, %s39
      %s43 = sphi 0, %s40
      %s44 = sphi 0, %s41
      %s45 = sphi 0, %s42
      %s61 = sphi 0, %s63
      %s64 = sphi 0, %s61
      %s65 = sphi 0, %s64
      %s81 = sphi 0, %s65
      %s87 = sphi 0, %s89
      %s90 = sphi 0, %s87
      %s91 = sphi 0, %s90
      %s107 = sphi 0, %s91
      %s111 = sphi 0, %s111
      %s113 = sphi 0, %s111
      %s114 = sphi 0, %s113
      %s128 = sphi 0, %s114
      %s132 = sphi 0, %s132
      %s134 = sphi 0, %s132
      %s135 = sphi 0, %s134
      %s149 = sphi 0, %s135
      %s153 = sphi 0, %s153
      %s155 = sphi 0, %s153
      %s156 = sphi 0, %s155
      %s170 = sphi 0, %s156
      %s174 = sphi 0, %s174
      %s176 = sphi 0, %s174
      %s177 = sphi 0, %s176
      %s191 = sphi 0, %s177
      %s197 = sphi 0, %s199
      %s200 = sphi 0, %s197
      %s201 = sphi 0, %s200
      %s217 = sphi 0, %s201
      %s221 = sphi 0, %s221
      %s223 = sphi 0, %s221
      %s224 = sphi 0, %s223
      %s238 = sphi 0, %s224
      %s242 = sphi 0, %s242
      %s244 = sphi 0, %s242
      %s245 = sphi 0, %s244
      %s259 = sphi 0, %s245
      %s263 = sphi 0, %s263
      %s265 = sphi 0, %s263
      %s266 = sphi 0, %s265
      %s280 = sphi 0, %s266
      %s284 = sphi 0, %s284
      %s286 = sphi 0, %s284
      %s287 = sphi 0, %s286
      %s301 = sphi 0, %s287
      %s305 = sphi 0, %s305
      %s307 = sphi 0, %s305
      %s308 = sphi 0, %s307
      %s322 = sphi 0, %s308
      %s326 = sphi 0, %s326
      %s328 = sphi 0, %s326
      %s329 = sphi 0, %s328
      %s343 = sphi 0, %s329
      %s347 = sphi 0, %s347
      %s349 = sphi 0, %s347
      %s350 = sphi 0, %s349
      %s364 = sphi 0, %s350
      %s368 = sphi 0, %s368
      %s370 = sphi 0, %s368
      %s371 = sphi 0, %s370
      %s385 = sphi 0, %s371
      %s389 = sphi 0, %s389
      %s391 = sphi 0, %s389
      %s392 = sphi 0, %s391
      %s406 = sphi 0, %s392
      %s414 = sphi 0, %s416
      %s417 = sphi 0, %s414
      %s418 = sphi 0, %s417
      %s434 = sphi 0, %s418
      %s444 = sphi 0, %s446
      %s447 = sphi 0, %s444
      %s448 = sphi 0, %s447
      %s464 = sphi 0, %s448
    $region4: #{tpu_custom_call.1} parent=1 // loop_header_branch
      %33 = sbr.rel (%p31) target = $region8
    $region5: #{tpu_custom_call.1} parent=1 // loop_body
      %s35 = ssub.s32 %s30, 1
      %s36 = ssub.s32 %s30, 2
      %s46 = sadd.s32 1, %s39
      %p47 = scmp.ge.s32.totalorder %s46, 4
      %s48 = scalar_select %p47, 0, %s46
      %s49 = sadd.s32 1, %s38
      %s50 = scalar_select %p47, %s49, %s38
      %p51 = scmp.ge.s32.totalorder %s50, 1
      %s52 = scalar_select %p51, 0, %s50
      %s53 = sadd.s32 1, %s37
      %s54 = scalar_select %p51, %s53, %s37
      %p55 = scmp.ge.s32.totalorder %s54, 2
      %s56 = scalar_select %p55, 0, %s54
      %s57 = ssub.s32 %s37, %s56
      %s58 = ssub.s32 %s38, %s52
      %s59 = sor.u32 %s57, %s58
      %p60 = scmp.eq.s32.totalorder %s59, 0
      %s62 = sadd.s32 %s61, 1
      %s63 = scalar_select %p60, %s61, %s62
      %p66 = pneg %p60
      %p67 = scmp.eq.s32.totalorder %s30, 7
      %p68 = por %p66, %p67
      %p69 = scmp.ne.s32.totalorder %s61, %s64
      %p70 = scmp.eq.s32.totalorder %s30, 0
      %p71 = por %p69, %p70
      %p72 = scmp.ne.s32.totalorder %s61, %s64
      %p73 = scmp.eq.s32.totalorder %s35, 7
      %p74 = por %p72, %p73
      %p75 = scmp.ne.s32.totalorder %s64, %s65
      %p76 = scmp.eq.s32.totalorder %s35, 0
      %p77 = por %p75, %p76
      %p78 = scmp.ne.s32.totalorder %s64, %s65
      %p79 = scmp.eq.s32.totalorder %s36, 7
      %p80 = por %p78, %p79
      %p82 = scmp.ne.s32.totalorder %s65, %s81
      %p83 = scmp.eq.s32.totalorder %s36, 0
      %p84 = por %p82, %p83
      %s85 = ssub.s32 %s37, %s56
      %p86 = scmp.eq.s32.totalorder %s85, 0
      %s88 = sadd.s32 %s87, 1
      %s89 = scalar_select %p86, %s87, %s88
      %p92 = pneg %p86
      %p93 = scmp.eq.s32.totalorder %s30, 7
      %p94 = por %p92, %p93
      %p95 = scmp.ne.s32.totalorder %s87, %s90
      %p96 = scmp.eq.s32.totalorder %s30, 0
      %p97 = por %p95, %p96
      %p98 = scmp.ne.s32.totalorder %s87, %s90
      %p99 = scmp.eq.s32.totalorder %s35, 7
      %p100 = por %p98, %p99
      %p101 = scmp.ne.s32.totalorder %s90, %s91
      %p102 = scmp.eq.s32.totalorder %s35, 0
      %p103 = por %p101, %p102
      %p104 = scmp.ne.s32.totalorder %s90, %s91
      %p105 = scmp.eq.s32.totalorder %s36, 7
      %p106 = por %p104, %p105
      %p108 = scmp.ne.s32.totalorder %s91, %s107
      %p109 = scmp.eq.s32.totalorder %s36, 0
      %p110 = por %p108, %p109
      %s112 = sadd.s32 %s111, 1
      %p115 = scmp.eq.s32.totalorder %s30, 7
      %p116 = scmp.ne.s32.totalorder %s111, %s113
      %p117 = scmp.eq.s32.totalorder %s30, 0
      %p118 = por %p116, %p117
      %p119 = scmp.ne.s32.totalorder %s111, %s113
      %p120 = scmp.eq.s32.totalorder %s35, 7
      %p121 = por %p119, %p120
      %p122 = scmp.ne.s32.totalorder %s113, %s114
      %p123 = scmp.eq.s32.totalorder %s35, 0
      %p124 = por %p122, %p123
      %p125 = scmp.ne.s32.totalorder %s113, %s114
      %p126 = scmp.eq.s32.totalorder %s36, 7
      %p127 = por %p125, %p126
      %p129 = scmp.ne.s32.totalorder %s114, %s128
      %p130 = scmp.eq.s32.totalorder %s36, 0
      %p131 = por %p129, %p130
      %s133 = sadd.s32 %s132, 1
      %p136 = scmp.eq.s32.totalorder %s30, 7
      %p137 = scmp.ne.s32.totalorder %s132, %s134
      %p138 = scmp.eq.s32.totalorder %s30, 0
      %p139 = por %p137, %p138
      %p140 = scmp.ne.s32.totalorder %s132, %s134
      %p141 = scmp.eq.s32.totalorder %s35, 7
      %p142 = por %p140, %p141
      %p143 = scmp.ne.s32.totalorder %s134, %s135
      %p144 = scmp.eq.s32.totalorder %s35, 0
      %p145 = por %p143, %p144
      %p146 = scmp.ne.s32.totalorder %s134, %s135
      %p147 = scmp.eq.s32.totalorder %s36, 7
      %p148 = por %p146, %p147
      %p150 = scmp.ne.s32.totalorder %s135, %s149
      %p151 = scmp.eq.s32.totalorder %s36, 0
      %p152 = por %p150, %p151
      %s154 = sadd.s32 %s153, 1
      %p157 = scmp.eq.s32.totalorder %s30, 7
      %p158 = scmp.ne.s32.totalorder %s153, %s155
      %p159 = scmp.eq.s32.totalorder %s30, 0
      %p160 = por %p158, %p159
      %p161 = scmp.ne.s32.totalorder %s153, %s155
      %p162 = scmp.eq.s32.totalorder %s35, 7
      %p163 = por %p161, %p162
      %p164 = scmp.ne.s32.totalorder %s155, %s156
      %p165 = scmp.eq.s32.totalorder %s35, 0
      %p166 = por %p164, %p165
      %p167 = scmp.ne.s32.totalorder %s155, %s156
      %p168 = scmp.eq.s32.totalorder %s36, 7
      %p169 = por %p167, %p168
      %p171 = scmp.ne.s32.totalorder %s156, %s170
      %p172 = scmp.eq.s32.totalorder %s36, 0
      %p173 = por %p171, %p172
      %s175 = sadd.s32 %s174, 1
      %p178 = scmp.eq.s32.totalorder %s30, 7
      %p179 = scmp.ne.s32.totalorder %s174, %s176
      %p180 = scmp.eq.s32.totalorder %s30, 0
      %p181 = por %p179, %p180
      %p182 = scmp.ne.s32.totalorder %s174, %s176
      %p183 = scmp.eq.s32.totalorder %s35, 7
      %p184 = por %p182, %p183
      %p185 = scmp.ne.s32.totalorder %s176, %s177
      %p186 = scmp.eq.s32.totalorder %s35, 0
      %p187 = por %p185, %p186
      %p188 = scmp.ne.s32.totalorder %s176, %s177
      %p189 = scmp.eq.s32.totalorder %s36, 7
      %p190 = por %p188, %p189
      %p192 = scmp.ne.s32.totalorder %s177, %s191
      %p193 = scmp.eq.s32.totalorder %s36, 0
      %p194 = por %p192, %p193
      %s195 = ssub.s32 %s39, %s48
      %p196 = scmp.eq.s32.totalorder %s195, 0
      %s198 = sadd.s32 %s197, 1
      %s199 = scalar_select %p196, %s197, %s198
      %p202 = pneg %p196
      %p203 = scmp.eq.s32.totalorder %s30, 7
      %p204 = por %p202, %p203
      %p205 = scmp.ne.s32.totalorder %s197, %s200
      %p206 = scmp.eq.s32.totalorder %s30, 0
      %p207 = por %p205, %p206
      %p208 = scmp.ne.s32.totalorder %s197, %s200
      %p209 = scmp.eq.s32.totalorder %s35, 7
      %p210 = por %p208, %p209
      %p211 = scmp.ne.s32.totalorder %s200, %s201
      %p212 = scmp.eq.s32.totalorder %s35, 0
      %p213 = por %p211, %p212
      %p214 = scmp.ne.s32.totalorder %s200, %s201
      %p215 = scmp.eq.s32.totalorder %s36, 7
      %p216 = por %p214, %p215
      %p218 = scmp.ne.s32.totalorder %s201, %s217
      %p219 = scmp.eq.s32.totalorder %s36, 0
      %p220 = por %p218, %p219
      %s222 = sadd.s32 %s221, 1
      %p225 = scmp.eq.s32.totalorder %s30, 7
      %p226 = scmp.ne.s32.totalorder %s221, %s223
      %p227 = scmp.eq.s32.totalorder %s30, 0
      %p228 = por %p226, %p227
      %p229 = scmp.ne.s32.totalorder %s221, %s223
      %p230 = scmp.eq.s32.totalorder %s35, 7
      %p231 = por %p229, %p230
      %p232 = scmp.ne.s32.totalorder %s223, %s224
      %p233 = scmp.eq.s32.totalorder %s35, 0
      %p234 = por %p232, %p233
      %p235 = scmp.ne.s32.totalorder %s223, %s224
      %p236 = scmp.eq.s32.totalorder %s36, 7
      %p237 = por %p235, %p236
      %p239 = scmp.ne.s32.totalorder %s224, %s238
      %p240 = scmp.eq.s32.totalorder %s36, 0
      %p241 = por %p239, %p240
      %s243 = sadd.s32 %s242, 1
      %p246 = scmp.eq.s32.totalorder %s30, 7
      %p247 = scmp.ne.s32.totalorder %s242, %s244
      %p248 = scmp.eq.s32.totalorder %s30, 0
      %p249 = por %p247, %p248
      %p250 = scmp.ne.s32.totalorder %s242, %s244
      %p251 = scmp.eq.s32.totalorder %s35, 7
      %p252 = por %p250, %p251
      %p253 = scmp.ne.s32.totalorder %s244, %s245
      %p254 = scmp.eq.s32.totalorder %s35, 0
      %p255 = por %p253, %p254
      %p256 = scmp.ne.s32.totalorder %s244, %s245
      %p257 = scmp.eq.s32.totalorder %s36, 7
      %p258 = por %p256, %p257
      %p260 = scmp.ne.s32.totalorder %s245, %s259
      %p261 = scmp.eq.s32.totalorder %s36, 0
      %p262 = por %p260, %p261
      %s264 = sadd.s32 %s263, 1
      %p267 = scmp.eq.s32.totalorder %s30, 7
      %p268 = scmp.ne.s32.totalorder %s263, %s265
      %p269 = scmp.eq.s32.totalorder %s30, 0
      %p270 = por %p268, %p269
      %p271 = scmp.ne.s32.totalorder %s263, %s265
      %p272 = scmp.eq.s32.totalorder %s35, 7
      %p273 = por %p271, %p272
      %p274 = scmp.ne.s32.totalorder %s265, %s266
      %p275 = scmp.eq.s32.totalorder %s35, 0
      %p276 = por %p274, %p275
      %p277 = scmp.ne.s32.totalorder %s265, %s266
      %p278 = scmp.eq.s32.totalorder %s36, 7
      %p279 = por %p277, %p278
      %p281 = scmp.ne.s32.totalorder %s266, %s280
      %p282 = scmp.eq.s32.totalorder %s36, 0
      %p283 = por %p281, %p282
      %s285 = sadd.s32 %s284, 1
      %p288 = scmp.eq.s32.totalorder %s30, 7
      %p289 = scmp.ne.s32.totalorder %s284, %s286
      %p290 = scmp.eq.s32.totalorder %s30, 0
      %p291 = por %p289, %p290
      %p292 = scmp.ne.s32.totalorder %s284, %s286
      %p293 = scmp.eq.s32.totalorder %s35, 7
      %p294 = por %p292, %p293
      %p295 = scmp.ne.s32.totalorder %s286, %s287
      %p296 = scmp.eq.s32.totalorder %s35, 0
      %p297 = por %p295, %p296
      %p298 = scmp.ne.s32.totalorder %s286, %s287
      %p299 = scmp.eq.s32.totalorder %s36, 7
      %p300 = por %p298, %p299
      %p302 = scmp.ne.s32.totalorder %s287, %s301
      %p303 = scmp.eq.s32.totalorder %s36, 0
      %p304 = por %p302, %p303
      %s306 = sadd.s32 %s305, 1
      %p309 = scmp.eq.s32.totalorder %s30, 7
      %p310 = scmp.ne.s32.totalorder %s305, %s307
      %p311 = scmp.eq.s32.totalorder %s30, 0
      %p312 = por %p310, %p311
      %p313 = scmp.ne.s32.totalorder %s305, %s307
      %p314 = scmp.eq.s32.totalorder %s35, 7
      %p315 = por %p313, %p314
      %p316 = scmp.ne.s32.totalorder %s307, %s308
      %p317 = scmp.eq.s32.totalorder %s35, 0
      %p318 = por %p316, %p317
      %p319 = scmp.ne.s32.totalorder %s307, %s308
      %p320 = scmp.eq.s32.totalorder %s36, 7
      %p321 = por %p319, %p320
      %p323 = scmp.ne.s32.totalorder %s308, %s322
      %p324 = scmp.eq.s32.totalorder %s36, 0
      %p325 = por %p323, %p324
      %s327 = sadd.s32 %s326, 1
      %p330 = scmp.eq.s32.totalorder %s30, 7
      %p331 = scmp.ne.s32.totalorder %s326, %s328
      %p332 = scmp.eq.s32.totalorder %s30, 0
      %p333 = por %p331, %p332
      %p334 = scmp.ne.s32.totalorder %s326, %s328
      %p335 = scmp.eq.s32.totalorder %s35, 7
      %p336 = por %p334, %p335
      %p337 = scmp.ne.s32.totalorder %s328, %s329
      %p338 = scmp.eq.s32.totalorder %s35, 0
      %p339 = por %p337, %p338
      %p340 = scmp.ne.s32.totalorder %s328, %s329
      %p341 = scmp.eq.s32.totalorder %s36, 7
      %p342 = por %p340, %p341
      %p344 = scmp.ne.s32.totalorder %s329, %s343
      %p345 = scmp.eq.s32.totalorder %s36, 0
      %p346 = por %p344, %p345
      %s348 = sadd.s32 %s347, 1
      %p351 = scmp.eq.s32.totalorder %s30, 7
      %p352 = scmp.ne.s32.totalorder %s347, %s349
      %p353 = scmp.eq.s32.totalorder %s30, 0
      %p354 = por %p352, %p353
      %p355 = scmp.ne.s32.totalorder %s347, %s349
      %p356 = scmp.eq.s32.totalorder %s35, 7
      %p357 = por %p355, %p356
      %p358 = scmp.ne.s32.totalorder %s349, %s350
      %p359 = scmp.eq.s32.totalorder %s35, 0
      %p360 = por %p358, %p359
      %p361 = scmp.ne.s32.totalorder %s349, %s350
      %p362 = scmp.eq.s32.totalorder %s36, 7
      %p363 = por %p361, %p362
      %p365 = scmp.ne.s32.totalorder %s350, %s364
      %p366 = scmp.eq.s32.totalorder %s36, 0
      %p367 = por %p365, %p366
      %s369 = sadd.s32 %s368, 1
      %p372 = scmp.eq.s32.totalorder %s30, 7
      %p373 = scmp.ne.s32.totalorder %s368, %s370
      %p374 = scmp.eq.s32.totalorder %s30, 0
      %p375 = por %p373, %p374
      %p376 = scmp.ne.s32.totalorder %s368, %s370
      %p377 = scmp.eq.s32.totalorder %s35, 7
      %p378 = por %p376, %p377
      %p379 = scmp.ne.s32.totalorder %s370, %s371
      %p380 = scmp.eq.s32.totalorder %s35, 0
      %p381 = por %p379, %p380
      %p382 = scmp.ne.s32.totalorder %s370, %s371
      %p383 = scmp.eq.s32.totalorder %s36, 7
      %p384 = por %p382, %p383
      %p386 = scmp.ne.s32.totalorder %s371, %s385
      %p387 = scmp.eq.s32.totalorder %s36, 0
      %p388 = por %p386, %p387
      %s390 = sadd.s32 %s389, 1
      %p393 = scmp.eq.s32.totalorder %s30, 7
      %p394 = scmp.ne.s32.totalorder %s389, %s391
      %p395 = scmp.eq.s32.totalorder %s30, 0
      %p396 = por %p394, %p395
      %p397 = scmp.ne.s32.totalorder %s389, %s391
      %p398 = scmp.eq.s32.totalorder %s35, 7
      %p399 = por %p397, %p398
      %p400 = scmp.ne.s32.totalorder %s391, %s392
      %p401 = scmp.eq.s32.totalorder %s35, 0
      %p402 = por %p400, %p401
      %p403 = scmp.ne.s32.totalorder %s391, %s392
      %p404 = scmp.eq.s32.totalorder %s36, 7
      %p405 = por %p403, %p404
      %p407 = scmp.ne.s32.totalorder %s392, %s406
      %p408 = scmp.eq.s32.totalorder %s36, 0
      %p409 = por %p407, %p408
      %s410 = ssub.s32 %s37, %s56
      %s411 = ssub.s32 %s38, %s52
      %s412 = sor.u32 %s410, %s411
      %p413 = scmp.eq.s32.totalorder %s412, 0
      %s415 = sadd.s32 %s414, 1
      %s416 = scalar_select %p413, %s414, %s415
      %p419 = pneg %p413
      %p420 = scmp.eq.s32.totalorder %s30, 7
      %p421 = por %p419, %p420
      %p422 = scmp.ne.s32.totalorder %s414, %s417
      %p423 = scmp.eq.s32.totalorder %s30, 0
      %p424 = por %p422, %p423
      %p425 = scmp.ne.s32.totalorder %s414, %s417
      %p426 = scmp.eq.s32.totalorder %s35, 7
      %p427 = por %p425, %p426
      %p428 = scmp.ne.s32.totalorder %s417, %s418
      %p429 = scmp.eq.s32.totalorder %s35, 0
      %p430 = por %p428, %p429
      %p431 = scmp.ne.s32.totalorder %s417, %s418
      %p432 = scmp.eq.s32.totalorder %s36, 7
      %p433 = por %p431, %p432
      %p435 = scmp.ne.s32.totalorder %s418, %s434
      %p436 = scmp.eq.s32.totalorder %s36, 0
      %p437 = por %p435, %p436
      %s438 = ssub.s32 %s37, %s56
      %s439 = ssub.s32 %s39, %s48
      %s440 = sor.u32 %s438, %s439
      %s441 = ssub.s32 %s38, %s52
      %s442 = sor.u32 %s440, %s441
      %p443 = scmp.eq.s32.totalorder %s442, 0
      %s445 = sadd.s32 %s444, 1
      %s446 = scalar_select %p443, %s444, %s445
      %p449 = pneg %p443
      %p450 = scmp.eq.s32.totalorder %s30, 7
      %p451 = por %p449, %p450
      %p452 = scmp.ne.s32.totalorder %s444, %s447
      %p453 = scmp.eq.s32.totalorder %s30, 0
      %p454 = por %p452, %p453
      %p455 = scmp.ne.s32.totalorder %s444, %s447
      %p456 = scmp.eq.s32.totalorder %s35, 7
      %p457 = por %p455, %p456
      %p458 = scmp.ne.s32.totalorder %s447, %s448
      %p459 = scmp.eq.s32.totalorder %s35, 0
      %p460 = por %p458, %p459
      %p461 = scmp.ne.s32.totalorder %s447, %s448
      %p462 = scmp.eq.s32.totalorder %s36, 7
      %p463 = por %p461, %p462
      %p465 = scmp.ne.s32.totalorder %s448, %s464
      %p466 = scmp.eq.s32.totalorder %s36, 0
      %p467 = por %p465, %p466
      %p468 = scmp.le.s32.totalorder 1, %s30
      %p469 = scmp.lt.s32.totalorder %s30, 9
      %p470 = pnand %p468, %p469
      %p471 = pneg %p470
      // Predicated region
      $region9: #{tpu_custom_call.1} parent=5 // pred_check
        _
      $region10: #{tpu_custom_call.1} parent=5 // pred_check_branch
        %473 = sbr.rel (%p470) target = $region12
      $region11: #{tpu_custom_call.1} parent=5 // pred_region
        %s474 = ssub.s32 %s30, 1
        // Predicated region
        $region13: #{tpu_custom_call.1} parent=11 // pred_check
          %p475 = pneg %p124
        $region14: #{tpu_custom_call.1} parent=11 // pred_check_branch
          %477 = sbr.rel (%p475) target = $region16
        $region15: #{tpu_custom_call.1} parent=11 // pred_region
          _
        $region16: #{tpu_custom_call.1} parent=11 // pred_fallthru
          _
        // Predicated region
        $region17: #{tpu_custom_call.1} parent=11 // pred_check
          %p478 = pneg %p145
        $region18: #{tpu_custom_call.1} parent=11 // pred_check_branch
          %480 = sbr.rel (%p478) target = $region20
        $region19: #{tpu_custom_call.1} parent=11 // pred_region
          _
        $region20: #{tpu_custom_call.1} parent=11 // pred_fallthru
          _
        // Predicated region
        $region21: #{tpu_custom_call.1} parent=11 // pred_check
          %p481 = pneg %p166
        $region22: #{tpu_custom_call.1} parent=11 // pred_check_branch
          %483 = sbr.rel (%p481) target = $region24
        $region23: #{tpu_custom_call.1} parent=11 // pred_region
          _
        $region24: #{tpu_custom_call.1} parent=11 // pred_fallthru
          _
        // Predicated region
        $region25: #{tpu_custom_call.1} parent=11 // pred_check
          %p484 = pneg %p187
        $region26: #{tpu_custom_call.1} parent=11 // pred_check_branch
          %486 = sbr.rel (%p484) target = $region28
        $region27: #{tpu_custom_call.1} parent=11 // pred_region
          _
        $region28: #{tpu_custom_call.1} parent=11 // pred_fallthru
          _
        // Predicated region
        $region29: #{tpu_custom_call.1} parent=11 // pred_check
          %p487 = pneg %p234
        $region30: #{tpu_custom_call.1} parent=11 // pred_check_branch
          %489 = sbr.rel (%p487) target = $region32
        $region31: #{tpu_custom_call.1} parent=11 // pred_region
          _
        $region32: #{tpu_custom_call.1} parent=11 // pred_fallthru
          _
        // Predicated region
        $region33: #{tpu_custom_call.1} parent=11 // pred_check
          %p490 = pneg %p255
        $region34: #{tpu_custom_call.1} parent=11 // pred_check_branch
          %492 = sbr.rel (%p490) target = $region36
        $region35: #{tpu_custom_call.1} parent=11 // pred_region
          _
        $region36: #{tpu_custom_call.1} parent=11 // pred_fallthru
          _
        // Predicated region
        $region37: #{tpu_custom_call.1} parent=11 // pred_check
          %p493 = pneg %p276
        $region38: #{tpu_custom_call.1} parent=11 // pred_check_branch
          %495 = sbr.rel (%p493) target = $region40
        $region39: #{tpu_custom_call.1} parent=11 // pred_region
          _
        $region40: #{tpu_custom_call.1} parent=11 // pred_fallthru
          _
        // Predicated region
        $region41: #{tpu_custom_call.1} parent=11 // pred_check
          %p496 = pneg %p297
        $region42: #{tpu_custom_call.1} parent=11 // pred_check_branch
          %498 = sbr.rel (%p496) target = $region44
        $region43: #{tpu_custom_call.1} parent=11 // pred_region
          _
        $region44: #{tpu_custom_call.1} parent=11 // pred_fallthru
          _
        // Predicated region
        $region45: #{tpu_custom_call.1} parent=11 // pred_check
          %p499 = pneg %p318
        $region46: #{tpu_custom_call.1} parent=11 // pred_check_branch
          %501 = sbr.rel (%p499) target = $region48
        $region47: #{tpu_custom_call.1} parent=11 // pred_region
          _
        $region48: #{tpu_custom_call.1} parent=11 // pred_fallthru
          _
        // Predicated region
        $region49: #{tpu_custom_call.1} parent=11 // pred_check
          %p502 = pneg %p339
        $region50: #{tpu_custom_call.1} parent=11 // pred_check_branch
          %504 = sbr.rel (%p502) target = $region52
        $region51: #{tpu_custom_call.1} parent=11 // pred_region
          _
        $region52: #{tpu_custom_call.1} parent=11 // pred_fallthru
          _
        // Predicated region
        $region53: #{tpu_custom_call.1} parent=11 // pred_check
          %p505 = pneg %p360
        $region54: #{tpu_custom_call.1} parent=11 // pred_check_branch
          %507 = sbr.rel (%p505) target = $region56
        $region55: #{tpu_custom_call.1} parent=11 // pred_region
          _
        $region56: #{tpu_custom_call.1} parent=11 // pred_fallthru
          _
        // Predicated region
        $region57: #{tpu_custom_call.1} parent=11 // pred_check
          %p508 = pneg %p381
        $region58: #{tpu_custom_call.1} parent=11 // pred_check_branch
          %510 = sbr.rel (%p508) target = $region60
        $region59: #{tpu_custom_call.1} parent=11 // pred_region
          _
        $region60: #{tpu_custom_call.1} parent=11 // pred_fallthru
          _
        // Predicated region
        $region61: #{tpu_custom_call.1} parent=11 // pred_check
          %p511 = pneg %p402
        $region62: #{tpu_custom_call.1} parent=11 // pred_check_branch
          %513 = sbr.rel (%p511) target = $region64
        $region63: #{tpu_custom_call.1} parent=11 // pred_region
          _
        $region64: #{tpu_custom_call.1} parent=11 // pred_fallthru
          _
      $region12: #{tpu_custom_call.1} parent=5 // pred_fallthru
        _
      %p514 = scmp.lt.s32.totalorder %s30, 8
      // Predicated region
      $region65: #{tpu_custom_call.1} parent=5 // pred_check
        %p515 = pneg %p514
      $region66: #{tpu_custom_call.1} parent=5 // pred_check_branch
        %517 = sbr.rel (%p515) target = $region68
      $region67: #{tpu_custom_call.1} parent=5 // pred_region
        // Predicated region
        $region69: #{tpu_custom_call.1} parent=67 // pred_check
          %p518 = pneg %p71
        $region70: #{tpu_custom_call.1} parent=67 // pred_check_branch
          %520 = sbr.rel (%p518) target = $region72
        $region71: #{tpu_custom_call.1} parent=67 // pred_region
          %p521 = scmp.lt.s32.totalorder %s37, 1
          %s522 = scalar_select %p521, %s37, 1
          %p523 = scmp.lt.s32.totalorder %s38, 0
          %s524 = scalar_select %p523, %s38, 0
          %s525 = sadd.s32 %s524, %s522
          %s526 = smul.addr %s525, 8
          %s527 = scalar_lea.vmem %s0, %s526
        $region72: #{tpu_custom_call.1} parent=67 // pred_fallthru
          _
        // Predicated region
        $region73: #{tpu_custom_call.1} parent=67 // pred_check
          %p528 = pneg %p97
        $region74: #{tpu_custom_call.1} parent=67 // pred_check_branch
          %530 = sbr.rel (%p528) target = $region76
        $region75: #{tpu_custom_call.1} parent=67 // pred_region
          %p531 = scmp.lt.s32.totalorder %s37, 1
          %s532 = scalar_select %p531, %s37, 1
          %s533 = smul.addr %s532, 8
          %s534 = scalar_lea.vmem %s1, %s533
        $region76: #{tpu_custom_call.1} parent=67 // pred_fallthru
          _
        // Predicated region
        $region77: #{tpu_custom_call.1} parent=67 // pred_check
          %p535 = pneg %p207
        $region78: #{tpu_custom_call.1} parent=67 // pred_check_branch
          %537 = sbr.rel (%p535) target = $region80
        $region79: #{tpu_custom_call.1} parent=67 // pred_region
          %p538 = scmp.lt.s32.totalorder %s39, 3
          %s539 = scalar_select %p538, %s39, 3
          %s540 = smul.addr %s539, 8
          %s541 = scalar_lea.vmem %s6, %s540
        $region80: #{tpu_custom_call.1} parent=67 // pred_fallthru
          _
      $region68: #{tpu_custom_call.1} parent=5 // pred_fallthru
        _
      %p542 = scmp.le.s32.totalorder 1, %s30
      %p543 = scmp.lt.s32.totalorder %s30, 9
      %p544 = pnand %p542, %p543
      %p545 = pneg %p544
      // Predicated region
      $region81: #{tpu_custom_call.1} parent=5 // pred_check
        _
      $region82: #{tpu_custom_call.1} parent=5 // pred_check_branch
        %547 = sbr.rel (%p544) target = $region84
      $region83: #{tpu_custom_call.1} parent=5 // pred_region
        %s548 = ssub.s32 %s30, 1
        %p549 = scmp.lt.s32.totalorder %s40, 1
        %s550 = scalar_select %p549, %s40, 1
        %p551 = scmp.lt.s32.totalorder %s41, 0
        %s552 = scalar_select %p551, %s41, 0
        %s553 = sadd.s32 %s552, %s550
        %s554 = smul.addr %s553, 8
        %s555 = scalar_lea.vmem %s0, %s554
        %p556 = pneg %p77
        %p557 = pneg %p74
        %p558 = scmp.lt.s32.totalorder %s40, 1
        %s559 = scalar_select %p558, %s40, 1
        %s560 = smul.addr %s559, 8
        %s561 = scalar_lea.vmem %s1, %s560
        %p562 = pneg %p103
        %p563 = pneg %p100
        %p564 = pneg %p124
        %p565 = pneg %p121
        %p566 = pneg %p145
        %p567 = pneg %p142
        %p568 = pneg %p166
        %p569 = pneg %p163
        %p570 = pneg %p187
        %p571 = pneg %p184
        %p572 = scmp.lt.s32.totalorder %s42, 3
        %s573 = scalar_select %p572, %s42, 3
        %s574 = smul.addr %s573, 8
        %s575 = scalar_lea.vmem %s6, %s574
        %p576 = pneg %p213
        %p577 = pneg %p210
        %p578 = pneg %p234
        %p579 = pneg %p231
        %p580 = pneg %p255
        %p581 = pneg %p252
        %p582 = pneg %p276
        %p583 = pneg %p273
        %p584 = pneg %p297
        %p585 = pneg %p294
        %p586 = pneg %p318
        %p587 = pneg %p315
        %p588 = pneg %p339
        %p589 = pneg %p336
        %p590 = pneg %p360
        %p591 = pneg %p357
        %p592 = pneg %p381
        %p593 = pneg %p378
        %p594 = pneg %p402
        %p595 = pneg %p399
        %p596 = pneg %p430
        %p597 = pneg %p427
        %s598 = sand.u32 %s417, 1
        %s599 = scalar_lea.sflag [#allocation6], %s598
        %s600 = sand.u32 %s417, 1
        %s601 = smul.addr %s600, 8
        %s602 = scalar_lea.vmem [#allocation5], %s601
        %p603 = pneg %p460
        %p604 = pneg %p457
        %s605 = sand.u32 %s447, 1
        %s606 = scalar_lea.sflag [#allocation8], %s605
        %s607 = sand.u32 %s447, 1
        %s608 = smul.addr %s607, 8
        %s609 = scalar_lea.vmem [#allocation7], %s608
        %p610 = scmp.lt.s32.totalorder %s40, 1
        %s611 = scalar_select %p610, %s40, 1
        %p612 = scmp.lt.s32.totalorder %s41, 0
        %s613 = scalar_select %p612, %s41, 0
        %s614 = sadd.s32 %s613, %s611
        %s615 = smul.addr %s614, 8
        %s616 = scalar_lea.vmem %s0, %s615
        %p617 = scmp.lt.s32.totalorder %s40, 1
        %s618 = scalar_select %p617, %s40, 1
        %s619 = smul.addr %s618, 8
        %s620 = scalar_lea.vmem %s1, %s619
        %p621 = scmp.lt.s32.totalorder %s42, 3
        %s622 = scalar_select %p621, %s42, 3
        %s623 = smul.addr %s622, 8
        %s624 = scalar_lea.vmem %s6, %s623
        %p625 = scmp.eq.s32.totalorder %s41, 0
        %p626 = scmp.eq.s32.totalorder %s42, 0
        %p627 = pnand %p625, %p626
        %p628 = pneg %p627
        // Predicated region
        $region85: #{tpu_custom_call.1} parent=83 // pred_check
          _
        $region86: #{tpu_custom_call.1} parent=83 // pred_check_branch
          %630 = sbr.rel (%p627) target = $region88
        $region87: #{tpu_custom_call.1} parent=83 // pred_region
          %v631 = vld [vmem:[%s620] sm:$0xff]
          %v632 = vld [vmem:[%s4] sm:$0xff]
          %v633 = vld [vmem:[%s4 + $0x8] sm:$0xff]
          %v634 = vld [vmem:[%s4 + $0x10] sm:$0xff]
          %v635 = vld [vmem:[%s4 + $0x18] sm:$0xff]
          %v636 = vld [vmem:[%s4 + $0x20] sm:$0xff]
          %v637 = vld [vmem:[%s4 + $0x28] sm:$0xff]
          %v638 = vld [vmem:[%s4 + $0x30] sm:$0xff]
          %v639 = vld [vmem:[%s4 + $0x38] sm:$0xff]
          %v640 = vld [vmem:[%s5] sm:$0xff]
          %v641 = vld [vmem:[%s5 + $0x8] sm:$0xff]
          %v642 = vld [vmem:[%s5 + $0x10] sm:$0xff]
          %v643 = vld [vmem:[%s5 + $0x18] sm:$0xff]
          %v644 = vld [vmem:[%s5 + $0x20] sm:$0xff]
          %v645 = vld [vmem:[%s5 + $0x28] sm:$0xff]
          %v646 = vld [vmem:[%s5 + $0x30] sm:$0xff]
          %v647 = vld [vmem:[%s5 + $0x38] sm:$0xff]
          %649 = vset.pattern.permute.xlu0 0
          %650 = vperm.xlu0 %649, %v640
          %v651 = vpop.permute.xlu0 %650
          %654 = vset.pattern.permute.xlu0 0
          %655 = vperm.xlu0 %654, %v641
          %v656 = vpop.permute.xlu0 %655
          %659 = vset.pattern.permute.xlu0 0
          %660 = vperm.xlu0 %659, %v642
          %v661 = vpop.permute.xlu0 %660
          %664 = vset.pattern.permute.xlu0 0
          %665 = vperm.xlu0 %664, %v643
          %v666 = vpop.permute.xlu0 %665
          %669 = vset.pattern.permute.xlu0 0
          %670 = vperm.xlu0 %669, %v644
          %v671 = vpop.permute.xlu0 %670
          %674 = vset.pattern.permute.xlu0 0
          %675 = vperm.xlu0 %674, %v645
          %v676 = vpop.permute.xlu0 %675
          %679 = vset.pattern.permute.xlu0 0
          %680 = vperm.xlu0 %679, %v646
          %v681 = vpop.permute.xlu0 %680
          %684 = vset.pattern.permute.xlu0 0
          %685 = vperm.xlu0 %684, %v647
          %v686 = vpop.permute.xlu0 %685
          %vm688 = vcmask 261120
          %v690 = vsel %vm688, %v632, 0
          %v693 = vsel %vm688, %v633, 0
          %v696 = vsel %vm688, %v634, 0
          %v699 = vsel %vm688, %v635, 0
          %v702 = vsel %vm688, %v636, 0
          %v705 = vsel %vm688, %v637, 0
          %v708 = vsel %vm688, %v638, 0
          %v711 = vsel %vm688, %v639, 0
          %v714 = vsel %vm688, %v631, 0
          %716 = vmatpush.xpose.msra.mxu0 0.0
          %717 = vmatpush.xpose.msra.mxu0 0.0
          %718 = vmatpush.xpose.msra.mxu0 0.0
          %719 = vmatpush.xpose.msra.mxu0 0.0
          %720 = vmatpush.xpose.msra.mxu0 0.0
          %721 = vmatpush.xpose.msra.mxu0 0.0
          %722 = vmatpush.xpose.msra.mxu0 0.0
          %723 = vmatpush.xpose.msra.mxu0 0.0
          %724 = vmatpush.xpose.msra.mxu0 0.0
          %725 = vmatpush.xpose.msra.mxu0 0.0
          %726 = vmatpush.xpose.msra.mxu0 0.0
          %727 = vmatpush.xpose.msra.mxu0 0.0
          %728 = vmatpush.xpose.msra.mxu0 0.0
          %729 = vmatpush.xpose.msra.mxu0 0.0
          %730 = vmatpush.xpose.msra.mxu0 0.0
          %731 = vmatpush.xpose.msra.mxu0 %v714
          %732 = vmatmul.f32.gmra.mxu0 %v690
          %v733 = vpop.f32.mrf.mxu0
          %v734 = vadd.f32 %v651, %v733
          %735 = vmatmul.f32.gmra.mxu0 %v693
          %v736 = vpop.f32.mrf.mxu0
          %v737 = vadd.f32 %v656, %v736
          %738 = vmatmul.f32.gmra.mxu0 %v696
          %v739 = vpop.f32.mrf.mxu0
          %v740 = vadd.f32 %v661, %v739
          %741 = vmatmul.f32.gmra.mxu0 %v699
          %v742 = vpop.f32.mrf.mxu0
          %v743 = vadd.f32 %v666, %v742
          %744 = vmatmul.f32.gmra.mxu0 %v702
          %v745 = vpop.f32.mrf.mxu0
          %v746 = vadd.f32 %v671, %v745
          %747 = vmatmul.f32.gmra.mxu0 %v705
          %v748 = vpop.f32.mrf.mxu0
          %v749 = vadd.f32 %v676, %v748
          %750 = vmatmul.f32.gmra.mxu0 %v708
          %v751 = vpop.f32.mrf.mxu0
          %v752 = vadd.f32 %v681, %v751
          %753 = vmatmul.f32.gmra.mxu0 %v711
          %v754 = vpop.f32.mrf.mxu0
          %v755 = vadd.f32 %v686, %v754
          %756 = vdwg.mxu0
          %vm757 = vcmask 64512
          %758 = vst.msk [vmem:[#allocation2] sm:$0xff] %vm757, %v734
          %759 = vst.msk [vmem:[#allocation2 + $0x8] sm:$0xff] %vm757, %v737
          %760 = vst.msk [vmem:[#allocation2 + $0x10] sm:$0xff] %vm757, %v740
          %761 = vst.msk [vmem:[#allocation2 + $0x18] sm:$0xff] %vm757, %v743
          %762 = vst.msk [vmem:[#allocation2 + $0x20] sm:$0xff] %vm757, %v746
          %763 = vst.msk [vmem:[#allocation2 + $0x28] sm:$0xff] %vm757, %v749
          %764 = vst.msk [vmem:[#allocation2 + $0x30] sm:$0xff] %vm757, %v752
          %765 = vst.msk [vmem:[#allocation2 + $0x38] sm:$0xff] %vm757, %v755
        $region88: #{tpu_custom_call.1} parent=83 // pred_fallthru
          _
        // Predicated region
        $region89: #{tpu_custom_call.1} parent=83 // pred_check
          %p766 = pneg %p626
        $region90: #{tpu_custom_call.1} parent=83 // pred_check_branch
          %768 = sbr.rel (%p766) target = $region92
        $region91: #{tpu_custom_call.1} parent=83 // pred_region
          %v769 = vld [vmem:[%s616] sm:$0xff]
          %v770 = vld [vmem:[%s2] sm:$0xff]
          %v771 = vld [vmem:[%s2 + $0x8] sm:$0xff]
          %v772 = vld [vmem:[%s2 + $0x10] sm:$0xff]
          %v773 = vld [vmem:[%s2 + $0x18] sm:$0xff]
          %v774 = vld [vmem:[%s3] sm:$0xff]
          %v775 = vld [vmem:[%s3 + $0x8] sm:$0xff]
          %v776 = vld [vmem:[%s3 + $0x10] sm:$0xff]
          %v777 = vld [vmem:[%s3 + $0x18] sm:$0xff]
          %779 = vset.pattern.permute.xlu0 0
          %780 = vperm.xlu0 %779, %v774
          %v781 = vpop.permute.xlu0 %780
          %784 = vset.pattern.permute.xlu0 0
          %785 = vperm.xlu0 %784, %v775
          %v786 = vpop.permute.xlu0 %785
          %789 = vset.pattern.permute.xlu0 0
          %790 = vperm.xlu0 %789, %v776
          %v791 = vpop.permute.xlu0 %790
          %794 = vset.pattern.permute.xlu0 0
          %795 = vperm.xlu0 %794, %v777
          %v796 = vpop.permute.xlu0 %795
          %vm798 = vcmask 261120
          %v800 = vsel %vm798, %v770, 0
          %v803 = vsel %vm798, %v771, 0
          %v806 = vsel %vm798, %v772, 0
          %v809 = vsel %vm798, %v773, 0
          %v812 = vsel %vm798, %v769, 0
          %814 = vmatpush.xpose.msra.mxu0 0.0
          %815 = vmatpush.xpose.msra.mxu0 0.0
          %816 = vmatpush.xpose.msra.mxu0 0.0
          %817 = vmatpush.xpose.msra.mxu0 0.0
          %818 = vmatpush.xpose.msra.mxu0 0.0
          %819 = vmatpush.xpose.msra.mxu0 0.0
          %820 = vmatpush.xpose.msra.mxu0 0.0
          %821 = vmatpush.xpose.msra.mxu0 0.0
          %822 = vmatpush.xpose.msra.mxu0 0.0
          %823 = vmatpush.xpose.msra.mxu0 0.0
          %824 = vmatpush.xpose.msra.mxu0 0.0
          %825 = vmatpush.xpose.msra.mxu0 0.0
          %826 = vmatpush.xpose.msra.mxu0 0.0
          %827 = vmatpush.xpose.msra.mxu0 0.0
          %828 = vmatpush.xpose.msra.mxu0 0.0
          %829 = vmatpush.xpose.msra.mxu0 %v812
          %830 = vmatmul.f32.gmra.mxu0 %v800
          %v831 = vpop.f32.mrf.mxu0
          %v832 = vadd.f32 %v781, %v831
          %833 = vmatmul.f32.gmra.mxu0 %v803
          %v834 = vpop.f32.mrf.mxu0
          %v835 = vadd.f32 %v786, %v834
          %836 = vmatmul.f32.gmra.mxu0 %v806
          %v837 = vpop.f32.mrf.mxu0
          %v838 = vadd.f32 %v791, %v837
          %839 = vmatmul.f32.gmra.mxu0 %v809
          %v840 = vpop.f32.mrf.mxu0
          %v841 = vadd.f32 %v796, %v840
          %842 = vdwg.mxu0
          %vm843 = vcmask 64512
          %844 = vst.msk [vmem:[#allocation3] sm:$0xff] %vm843, %v832
          %845 = vst.msk [vmem:[#allocation3 + $0x8] sm:$0xff] %vm843, %v835
          %846 = vst.msk [vmem:[#allocation3 + $0x10] sm:$0xff] %vm843, %v838
          %847 = vst.msk [vmem:[#allocation3 + $0x18] sm:$0xff] %vm843, %v841
          %848 = vst.msk [vmem:[#allocation4] sm:$0xff] %vm798, 0.0
        $region92: #{tpu_custom_call.1} parent=83 // pred_fallthru
          _
        %s849 = smul.u32 %s42, 8
        %s850 = scalar_lea.vmem [#allocation3], %s849
        %v851 = vld [vmem:[%s850] sm:$0xff]
        %s852 = scalar_lea.vmem [#allocation2], %s849
        %v853 = vld [vmem:[%s852] sm:$0xff]
        %s854 = sadd.s32 %s849, 32
        %s855 = scalar_lea.vmem [#allocation2], %s854
        %v856 = vld [vmem:[%s855] sm:$0xff]
        %857 = vxpose.xlu0.b32.start [1/16] %v851, 128
        %858 = vxpose.xlu0.b32.cont [2/16] 0.0, 128
        %859 = vxpose.xlu0.b32.cont [3/16] 0.0, 128
        %860 = vxpose.xlu0.b32.cont [4/16] 0.0, 128
        %861 = vxpose.xlu0.b32.cont [5/16] 0.0, 128
        %862 = vxpose.xlu0.b32.cont [6/16] 0.0, 128
        %863 = vxpose.xlu0.b32.cont [7/16] 0.0, 128
        %864 = vxpose.xlu0.b32.cont [8/16] 0.0, 128
        %865 = vxpose.xlu0.b32.cont [9/16] 0.0, 128
        %866 = vxpose.xlu0.b32.cont [10/16] 0.0, 128
        %867 = vxpose.xlu0.b32.cont [11/16] 0.0, 128
        %868 = vxpose.xlu0.b32.cont [12/16] 0.0, 128
        %869 = vxpose.xlu0.b32.cont [13/16] 0.0, 128
        %870 = vxpose.xlu0.b32.cont [14/16] 0.0, 128
        %871 = vxpose.xlu0.b32.cont [15/16] 0.0, 128
        %872 = vxpose.xlu0.b32.end [16/16] 0.0, 128
        %v873 = vpop.trf.xlu0
        %v874 = vpop.trf.xlu0
        %v875 = vpop.trf.xlu0
        %v876 = vpop.trf.xlu0
        %v877 = vpop.trf.xlu0
        %v878 = vpop.trf.xlu0
        %v879 = vpop.trf.xlu0
        %v880 = vpop.trf.xlu0
        %v881 = vpop.trf.xlu0
        %v882 = vpop.trf.xlu0
        %v883 = vpop.trf.xlu0
        %v884 = vpop.trf.xlu0
        %v885 = vpop.trf.xlu0
        %v886 = vpop.trf.xlu0
        %v887 = vpop.trf.xlu0
        %v888 = vpop.trf.xlu0
        %vm889 = vcmask 64512
        %v891 = vsel %vm889, %v873, 0
        %893 = vmatpush.msra.mxu0 0.0
        %894 = vmatpush.msra.mxu0 0.0
        %895 = vmatpush.msra.mxu0 0.0
        %896 = vmatpush.msra.mxu0 0.0
        %897 = vmatpush.msra.mxu0 0.0
        %898 = vmatpush.msra.mxu0 0.0
        %899 = vmatpush.msra.mxu0 0.0
        %900 = vmatpush.msra.mxu0 0.0
        %901 = vmatpush.msra.mxu0 0.0
        %902 = vmatpush.msra.mxu0 0.0
        %903 = vmatpush.msra.mxu0 0.0
        %904 = vmatpush.msra.mxu0 0.0
        %905 = vmatpush.msra.mxu0 0.0
        %906 = vmatpush.msra.mxu0 0.0
        %907 = vmatpush.msra.mxu0 0.0
        %908 = vmatpush.msra.mxu0 %v853
        %909 = vmatmul.f32.gmra.mxu0 %v891
        %v910 = vpop.f32.mrf.mxu0
        %v911 = vadd.f32 0.0, %v910
        %912 = vdwg.mxu0
        %v913 = vsel %vm889, %v911, -inf
        %914 = vmax.xlane.f32.xlu0 %v913
        %v915 = vpop.xlane.xlu0 %914
        %v916 = vsub.f32 %v911, %v915
        %v917 = vmul.f32 %v916, 1.442695
        %v918 = vpow.pop %v917
        %v919 = vsel %vm889, %v918, 0.0
        %920 = vadd.xlane.f32.xlu0 %v919
        %v921 = vpop.xlane.xlu0 %920
        %v922 = vrcp.pop %v921
        %v923 = vmul.f32 %v918, %v922
        %924 = vst.msk [vmem:[%s609] sm:$0xff] %vm889, %v923
        %v926 = vsel %vm889, %v923, 0
        %v929 = vsel %vm889, %v856, 0
        %931 = vmatpush.xpose.msra.mxu0 0.0
        %932 = vmatpush.xpose.msra.mxu0 0.0
        %933 = vmatpush.xpose.msra.mxu0 0.0
        %934 = vmatpush.xpose.msra.mxu0 0.0
        %935 = vmatpush.xpose.msra.mxu0 0.0
        %936 = vmatpush.xpose.msra.mxu0 0.0
        %937 = vmatpush.xpose.msra.mxu0 0.0
        %938 = vmatpush.xpose.msra.mxu0 0.0
        %939 = vmatpush.xpose.msra.mxu0 0.0
        %940 = vmatpush.xpose.msra.mxu0 0.0
        %941 = vmatpush.xpose.msra.mxu0 0.0
        %942 = vmatpush.xpose.msra.mxu0 0.0
        %943 = vmatpush.xpose.msra.mxu0 0.0
        %944 = vmatpush.xpose.msra.mxu0 0.0
        %945 = vmatpush.xpose.msra.mxu0 0.0
        %946 = vmatpush.xpose.msra.mxu0 %v929
        %947 = vmatmul.f32.gmra.mxu0 %v926
        %v948 = vpop.f32.mrf.mxu0
        %v949 = vadd.f32 0.0, %v948
        %950 = vdwg.mxu0
        %v951 = vld [vmem:[#allocation4] sm:$0xff]
        %v952 = vld [vmem:[%s624] sm:$0xff]
        %v954 = vsel %vm889, %v949, 0
        %956 = vmatpush.msra.mxu0 0.0
        %957 = vmatpush.msra.mxu0 0.0
        %958 = vmatpush.msra.mxu0 0.0
        %959 = vmatpush.msra.mxu0 0.0
        %960 = vmatpush.msra.mxu0 0.0
        %961 = vmatpush.msra.mxu0 0.0
        %962 = vmatpush.msra.mxu0 0.0
        %963 = vmatpush.msra.mxu0 0.0
        %964 = vmatpush.msra.mxu0 0.0
        %965 = vmatpush.msra.mxu0 0.0
        %966 = vmatpush.msra.mxu0 0.0
        %967 = vmatpush.msra.mxu0 0.0
        %968 = vmatpush.msra.mxu0 0.0
        %969 = vmatpush.msra.mxu0 0.0
        %970 = vmatpush.msra.mxu0 0.0
        %971 = vmatpush.msra.mxu0 %v952
        %972 = vmatmul.f32.gmra.mxu0 %v954
        %v973 = vpop.f32.mrf.mxu0
        %v974 = vadd.f32 0.0, %v973
        %975 = vdwg.mxu0
        %v976 = vadd.f32 %v951, %v974
        %vm977 = vcmask 261120
        %978 = vst.msk [vmem:[#allocation4] sm:$0xff] %vm977, %v976
        %p979 = scmp.eq.s32.totalorder %s42, 3
        // Predicated region
        $region93: #{tpu_custom_call.1} parent=83 // pred_check
          %p980 = pneg %p979
        $region94: #{tpu_custom_call.1} parent=83 // pred_check_branch
          %982 = sbr.rel (%p980) target = $region96
        $region95: #{tpu_custom_call.1} parent=83 // pred_region
          %v983 = vld [vmem:[%s616] sm:$0xff]
          %v984 = vld [vmem:[#allocation4] sm:$0xff]
          %v985 = vld [vmem:[%s7] sm:$0x1]
          %v987 = vperm.slane %v985, 0
          %v989 = vadd.f32 %v984, %v987
          %v990 = vadd.f32 %v983, %v989
          %v991 = vld [vmem:[%s12] sm:$0x1]
          %v992 = vld [vmem:[%s13] sm:$0x1]
          %v993 = vsel %vm977, %v990, 0.0
          %994 = vadd.xlane.f32.xlu0 %v993
          %v995 = vpop.xlane.xlu0 %994
          %v996 = vrcp.pop 32.0
          %v997 = vmul.f32 32.0, %v996
          %v998 = vsub.f32 1.0, %v997
          %v999 = vmul.f32 %v996, %v998
          %v1000 = vadd.f32 %v996, %v999
          %vm1001 = vweird.f32 %v996
          %v1002 = vsel %vm1001, %v996, %v1000
          %v1003 = vmul.f32 %v995, %v1002
          %v1004 = vsub.f32 %v990, %v1003
          %v1005 = vmul.f32 %v1004, %v1004
          %v1006 = vsel %vm977, %v1005, 0.0
          %1007 = vadd.xlane.f32.xlu0 %v1006
          %v1008 = vpop.xlane.xlu0 %1007
          %v1009 = vmul.f32 %v1008, %v1002
          %v1010 = vadd.f32 %v1009, 1e-05
          %v1011 = vrsqrt.pop %v1010
          %v1012 = vmul.f32 %v1011, %v1010
          %v1013 = vmul.f32 %v1012, %v1011
          %v1014 = vmul.f32 0.5, %v1013
          %v1015 = vsub.f32 1.5, %v1014
          %v1016 = vmul.f32 %v1011, %v1015
          %vm1017 = vweird.f32 %v1010
          %vm1018 = vweird.f32 %v1011
          %vm1019 = vmor %vm1017, %vm1018
          %v1020 = vsel %vm1019, %v1011, %v1016
          %v1021 = vmul.f32 %v1004, %v1020
          %v1023 = vperm.slane %v991, 0
          %v1025 = vmul.f32 %v1021, %v1023
          %v1027 = vperm.slane %v992, 0
          %v1029 = vadd.f32 %v1025, %v1027
          %v1030 = vld [vmem:[%s8] sm:$0xff]
          %v1031 = vld [vmem:[%s8 + $0x8] sm:$0xff]
          %v1032 = vld [vmem:[%s8 + $0x10] sm:$0xff]
          %v1033 = vld [vmem:[%s8 + $0x18] sm:$0xff]
          %v1034 = vld [vmem:[%s9] sm:$0x1]
          %v1036 = vperm.slane %v1034, 0
          %v1039 = vsel %vm977, %v1029, 0
          %1041 = vmatpush.msra.mxu0 0.0
          %1042 = vmatpush.msra.mxu0 0.0
          %1043 = vmatpush.msra.mxu0 0.0
          %1044 = vmatpush.msra.mxu0 0.0
          %1045 = vmatpush.msra.mxu0 0.0
          %1046 = vmatpush.msra.mxu0 0.0
          %1047 = vmatpush.msra.mxu0 0.0
          %1048 = vmatpush.msra.mxu0 0.0
          %1049 = vmatpush.msra.mxu0 0.0
          %1050 = vmatpush.msra.mxu0 0.0
          %1051 = vmatpush.msra.mxu0 0.0
          %1052 = vmatpush.msra.mxu0 0.0
          %1053 = vmatpush.msra.mxu0 %v1033
          %1054 = vmatpush.msra.mxu0 %v1032
          %1055 = vmatpush.msra.mxu0 %v1031
          %1056 = vmatpush.msra.mxu0 %v1030
          %1057 = vmatmul.f32.gmra.mxu0 %v1039
          %v1058 = vpop.f32.mrf.mxu0
          %v1059 = vadd.f32 %v1036, %v1058
          %1060 = vdwg.mxu0
          %v1061 = vmax.f32 %v1059, 0.0
          %v1062 = vld [vmem:[%s10] sm:$0xff]
          %v1063 = vld [vmem:[%s10 + $0x8] sm:$0xff]
          %v1064 = vld [vmem:[%s10 + $0x10] sm:$0xff]
          %v1065 = vld [vmem:[%s10 + $0x18] sm:$0xff]
          %v1066 = vld [vmem:[%s10 + $0x20] sm:$0xff]
          %v1067 = vld [vmem:[%s10 + $0x28] sm:$0xff]
          %v1068 = vld [vmem:[%s10 + $0x30] sm:$0xff]
          %v1069 = vld [vmem:[%s10 + $0x38] sm:$0xff]
          %v1070 = vld [vmem:[%s11] sm:$0x1]
          %v1072 = vperm.slane %v1070, 0
          %vm1074 = vcmask 523264
          %v1076 = vsel %vm1074, %v1061, 0
          %1078 = vmatpush.msra.mxu0 0.0
          %1079 = vmatpush.msra.mxu0 0.0
          %1080 = vmatpush.msra.mxu0 0.0
          %1081 = vmatpush.msra.mxu0 0.0
          %1082 = vmatpush.msra.mxu0 0.0
          %1083 = vmatpush.msra.mxu0 0.0
          %1084 = vmatpush.msra.mxu0 0.0
          %1085 = vmatpush.msra.mxu0 0.0
          %1086 = vmatpush.msra.mxu0 %v1069
          %1087 = vmatpush.msra.mxu0 %v1068
          %1088 = vmatpush.msra.mxu0 %v1067
          %1089 = vmatpush.msra.mxu0 %v1066
          %1090 = vmatpush.msra.mxu0 %v1065
          %1091 = vmatpush.msra.mxu0 %v1064
          %1092 = vmatpush.msra.mxu0 %v1063
          %1093 = vmatpush.msra.mxu0 %v1062
          %1094 = vmatmul.f32.gmra.mxu0 %v1076
          %v1095 = vpop.f32.mrf.mxu0
          %v1096 = vadd.f32 %v1072, %v1095
          %1097 = vdwg.mxu0
          %v1098 = vadd.f32 %v1029, %v1096
          %v1099 = vld [vmem:[%s14] sm:$0x1]
          %v1100 = vld [vmem:[%s15] sm:$0x1]
          %v1101 = vsel %vm977, %v1098, 0.0
          %1102 = vadd.xlane.f32.xlu0 %v1101
          %v1103 = vpop.xlane.xlu0 %1102
          %v1104 = vmul.f32 %v1103, %v1002
          %v1105 = vsub.f32 %v1098, %v1104
          %v1106 = vmul.f32 %v1105, %v1105
          %v1107 = vsel %vm977, %v1106, 0.0
          %1108 = vadd.xlane.f32.xlu0 %v1107
          %v1109 = vpop.xlane.xlu0 %1108
          %v1110 = vmul.f32 %v1109, %v1002
          %v1111 = vadd.f32 %v1110, 1e-05
          %v1112 = vrsqrt.pop %v1111
          %v1113 = vmul.f32 %v1112, %v1111
          %v1114 = vmul.f32 %v1113, %v1112
          %v1115 = vmul.f32 0.5, %v1114
          %v1116 = vsub.f32 1.5, %v1115
          %v1117 = vmul.f32 %v1112, %v1116
          %vm1118 = vweird.f32 %v1111
          %vm1119 = vweird.f32 %v1112
          %vm1120 = vmor %vm1118, %vm1119
          %v1121 = vsel %vm1120, %v1112, %v1117
          %v1122 = vmul.f32 %v1105, %v1121
          %v1124 = vperm.slane %v1099, 0
          %v1126 = vmul.f32 %v1122, %v1124
          %v1128 = vperm.slane %v1100, 0
          %v1130 = vadd.f32 %v1126, %v1128
          %1131 = vst.msk [vmem:[%s602] sm:$0xff] %vm977, %v1130
        $region96: #{tpu_custom_call.1} parent=83 // pred_fallthru
          _
        %s1132 = sand.u32 %s417, 1
        %s1133 = scalar_lea.sflag [#allocation6], %s1132
        %s1134 = sand.u32 %s417, 1
        %s1135 = smul.addr %s1134, 8
        %s1136 = scalar_lea.vmem [#allocation5], %s1135
        %s1137 = sand.u32 %s447, 1
        %s1138 = scalar_lea.sflag [#allocation8], %s1137
        %s1139 = sand.u32 %s447, 1
        %s1140 = smul.addr %s1139, 8
        %s1141 = scalar_lea.vmem [#allocation7], %s1140
        // Predicated region
        $region97: #{tpu_custom_call.1} parent=83 // pred_check
          %p1142 = pneg %p427
        $region98: #{tpu_custom_call.1} parent=83 // pred_check_branch
          %1144 = sbr.rel (%p1142) target = $region100
        $region99: #{tpu_custom_call.1} parent=83 // pred_region
          %1146 = vsyncadd %s1133, 0
          %s1147 = sadd.s32 %s41, %s40
          %s1148 = smul.addr %s1147, 8
          %s1149 = scalar_lea.hbm %s16, %s1148
          %s1151 = sshll.u32 %s1136, 4
          %s1152 = int_to_ptr.vmem [resolvable:$true] %s1151
          %s1153 = sshll.u32 %s1149, 4
          %s1154 = int_to_ptr.hbm [resolvable:$true] %s1153
          %1156 = dma.vmem_to_hbm [thread:$0]  %s1152, 128, %s1154, %s1133
        $region100: #{tpu_custom_call.1} parent=83 // pred_fallthru
          _
        // Predicated region
        $region101: #{tpu_custom_call.1} parent=83 // pred_check
          %p1157 = pneg %p457
        $region102: #{tpu_custom_call.1} parent=83 // pred_check_branch
          %1159 = sbr.rel (%p1157) target = $region104
        $region103: #{tpu_custom_call.1} parent=83 // pred_region
          %1161 = vsyncadd %s1138, 0
          %s1162 = sadd.s32 %s41, %s42
          %s1163 = smul.addr %s40, 4
          %s1164 = sadd.s32 %s1162, %s1163
          %s1165 = smul.addr %s1164, 8
          %s1166 = scalar_lea.hbm %s17, %s1165
          %s1168 = sshll.u32 %s1141, 4
          %s1169 = int_to_ptr.vmem [resolvable:$true] %s1168
          %s1170 = sshll.u32 %s1166, 4
          %s1171 = int_to_ptr.hbm [resolvable:$true] %s1170
          %1173 = dma.vmem_to_hbm [thread:$0]  %s1169, 128, %s1171, %s1138
        $region104: #{tpu_custom_call.1} parent=83 // pred_fallthru
          _
      $region84: #{tpu_custom_call.1} parent=5 // pred_fallthru
        _
      %p1174 = scmp.le.s32.totalorder 2, %s30
      // Predicated region
      $region105: #{tpu_custom_call.1} parent=5 // pred_check
        %p1175 = pneg %p1174
      $region106: #{tpu_custom_call.1} parent=5 // pred_check_branch
        %1177 = sbr.rel (%p1175) target = $region108
      $region107: #{tpu_custom_call.1} parent=5 // pred_region
        %s1178 = ssub.s32 %s30, 2
        // Predicated region
        $region109: #{tpu_custom_call.1} parent=107 // pred_check
          %p1179 = pneg %p433
        $region110: #{tpu_custom_call.1} parent=107 // pred_check_branch
          %1181 = sbr.rel (%p1179) target = $region112
        $region111: #{tpu_custom_call.1} parent=107 // pred_region
          %s1182 = sand.u32 %s418, 1
          %s1183 = scalar_lea.sflag [#allocation6], %s1182
          %s1184 = sand.u32 %s418, 1
          %s1185 = smul.addr %s1184, 8
          %s1186 = scalar_lea.vmem [#allocation5], %s1185
          %1188 = dma.done %s1183, 128
        $region112: #{tpu_custom_call.1} parent=107 // pred_fallthru
          _
        // Predicated region
        $region113: #{tpu_custom_call.1} parent=107 // pred_check
          %p1189 = pneg %p463
        $region114: #{tpu_custom_call.1} parent=107 // pred_check_branch
          %1191 = sbr.rel (%p1189) target = $region116
        $region115: #{tpu_custom_call.1} parent=107 // pred_region
          %s1192 = sand.u32 %s448, 1
          %s1193 = scalar_lea.sflag [#allocation8], %s1192
          %s1194 = sand.u32 %s448, 1
          %s1195 = smul.addr %s1194, 8
          %s1196 = scalar_lea.vmem [#allocation7], %s1195
          %1198 = dma.done %s1193, 128
        $region116: #{tpu_custom_call.1} parent=107 // pred_fallthru
          _
      $region108: #{tpu_custom_call.1} parent=5 // pred_fallthru
        _
    $region6: #{tpu_custom_call.1} parent=1 // loop_footer
      %s34 = sadd.s32 1, %s30
    $region7: #{tpu_custom_call.1} parent=1 // loop_footer_branch
      %29 = sbr.rel target = $region3
    $region8: #{tpu_custom_call.1} parent=1 // loop_exit
      _
    %1199 = vsyncpa [#allocation6], 1
    %s1200 = scalar_lea.sflag [#allocation6], 1
    %1201 = vsyncpa %s1200, 1
    %1202 = vsyncpa [#allocation8], 1
    %s1203 = scalar_lea.sflag [#allocation8], 1
    %1204 = vsyncpa %s1203, 1

</llo_original>
